<compile_context>
chip_gen: v6e
topology: v6e:2x2x1
jax: 0.10.0
libtpu: 0.0.40
codegen_flags: <defaults>
</compile_context>

<pallas_src>
import jax
import jax.numpy as jnp
from jax import lax
from jax.experimental import pallas as pl
from jax.experimental.pallas import tpu as pltpu


def _round_up(x, m):
    return (x + m - 1) // m * m


def _chunk_len(S, target=32):
    """Largest divisor of S that is <= target (chunked time streaming)."""
    t = min(S, target)
    while S % t:
        t -= 1
    return t


def _sigmoid(x):
    # tanh-form sigmoid: one EUP op + two cheap VALU ops instead of exp followed
    # by a dependent divide on the serial recurrence critical path.
    return 0.5 * jnp.tanh(0.5 * x) + 0.5


def _pad_gates(w, H, Hp):
    """PyTorch gate-stacked (4H, ...) [i;f;g;o] -> (4, Hp, ...) zero-padded."""
    w4 = w.reshape(4, H, *w.shape[1:])
    pad = [(0, 0), (0, Hp - H)] + [(0, 0)] * (w4.ndim - 2)
    return jnp.pad(w4, pad)


def _make_kernel(S, T, TB, G, H2, unroll):
    n_chunks = S // T

    def kernel(xp_hbm, whh_ref, wfc_ref, bfc_ref, out_ref, xbuf, h_sc, c_sc, sem):
        # batch block handled by this grid step (grid axis is "parallel")
        b0 = pl.multiple_of(pl.program_id(0) * TB, TB)
        whh = whh_ref[...]                     # hoist recurrent weights out of the loops

        def fetch(ci, slot):
            pltpu.make_async_copy(
                xp_hbm.at[pl.ds(ci * T, T), pl.ds(b0, TB)],
                xbuf.at[pl.ds(slot * T, T)],
                sem.at[slot],
            ).start()

        fetch(0, 0)                            # prime slot 0
        h_sc[...] = jnp.zeros_like(h_sc)
        c_sc[...] = jnp.zeros_like(c_sc)

        @pl.loop(0, n_chunks)
        def _(ci):
            slot = ci & 1
            # wait on the chunk we are about to consume
            pltpu.make_async_copy(
                xp_hbm.at[pl.ds(0, T), pl.ds(b0, TB)],
                xbuf.at[pl.ds(0, T)],
                sem.at[slot],
            ).wait()

            @pl.when(ci + 1 < n_chunks)
            def _():
                fetch(ci + 1, 1 - slot)        # prefetch next chunk into the other slot

            base = slot * T

            def step(t, hc):
                # gate layout (lane-aligned, H2 = 2*Hp is a multiple of 128):
                #   [ i_f,i_b | f_f,f_b | g_f,g_b | o_f,o_b ]
                h, c = hc
                gates = xbuf[base + t] + jnp.dot(
                    h, whh, preferred_element_type=jnp.float32)
                i = _sigmoid(gates[:, 0 * H2:1 * H2])
                f = _sigmoid(gates[:, 1 * H2:2 * H2])
                g = jnp.tanh(gates[:, 2 * H2:3 * H2])
                o = _sigmoid(gates[:, 3 * H2:4 * H2])
                c = f * c + i * g
                h = o * jnp.tanh(c)
                return h, c

            h, c = lax.fori_loop(0, T, step, (h_sc[...], c_sc[...]), unroll=unroll)
            h_sc[...] = h
            c_sc[...] = c

        # classifier over concat([h_fwd_final, h_bwd_final]) == h_sc; lane-dense
        # padded output (sliced to the real output_dim outside the kernel).
        out_ref[...] = (jnp.dot(h_sc[...], wfc_ref[...],
                                preferred_element_type=jnp.float32)
                        + bfc_ref[...])

    return kernel


@jax.jit
def bilstm_forward(x_ids, params):
    """x_ids: (S, B) int32 token ids (seq-first, as nn.LSTM default).
    Returns (B, output_dim) float32, matching BiLSTM.forward."""
    S, B = x_ids.shape
    H = params["whh_f"].shape[1]
    O = params["fc_w"].shape[0]

    Hp = _round_up(H, 64)           # 2*Hp % 128 == 0 -> gate slices on vreg lane boundaries
    Bp = _round_up(max(B, 8), 8)    # >= 8 sublanes per f32 tile
    Op = _round_up(O, 128)          # lane-dense classifier writeback
    G, H2 = 8 * Hp, 2 * Hp

    # ---- embedding gather + hoisted input projections (XLA-side, fuse w/ gather) ----
    x_pad = jnp.pad(x_ids, ((0, 0), (0, Bp - B)))
    embeds = jnp.take(params["embedding"], x_pad, axis=0)              # (S, Bp, E)

    wih_f = _pad_gates(params["wih_f"], H, Hp)                         # (4, Hp, E)
    wih_b = _pad_gates(params["wih_b"], H, Hp)
    # ONE merged pre-activation stream: forward lanes read timestep t, backward
    # lanes read timestep S-1-t (time reversal done here in XLA).
    xf = jnp.einsum("sbe,ghe->sbgh", embeds, wih_f)                    # (S, Bp, 4, Hp)
    xb = jnp.einsum("sbe,ghe->sbgh", embeds[::-1], wih_b)              # (S, Bp, 4, Hp)
    b_f = _pad_gates(params["bih_f"] + params["bhh_f"], H, Hp)         # (4, Hp)
    b_b = _pad_gates(params["bih_b"] + params["bhh_b"], H, Hp)
    bias = jnp.stack([b_f, b_b], axis=1).reshape(1, 1, G)              # added exactly once
    xp = jnp.stack([xf, xb], axis=3).reshape(S, Bp, G) + bias          # (S, Bp, 8Hp) f32

    # ---- block-diagonal recurrent weights: rows = [h_f | h_b], cols gate-major ----
    def _hh(w):
        w4 = _pad_gates(w, H, Hp)                                      # (4, Hp, H)
        return jnp.pad(w4, ((0, 0), (0, 0), (0, Hp - H)))              # (4, Hp, Hp)

    whh_f4, whh_b4 = _hh(params["whh_f"]), _hh(params["whh_b"])
    z4 = jnp.zeros_like(whh_f4)
    blk_f = jnp.stack([whh_f4, z4], axis=1).reshape(G, Hp).T           # (Hp, G): rows = h_f
    blk_b = jnp.stack([z4, whh_b4], axis=1).reshape(G, Hp).T           # (Hp, G): rows = h_b
    whh_gm = jnp.concatenate([blk_f, blk_b], axis=0)                   # (2Hp, G)

    # ---- classifier head, padded to a lane-dense (., Op) output ----
    wfc_t = params["fc_w"].T                                           # (2H, O)
    wfc = jnp.zeros((H2, Op), jnp.float32)
    wfc = wfc.at[:H, :O].set(wfc_t[:H]).at[Hp:Hp + H, :O].set(wfc_t[H:])
    bfc = jnp.zeros((1, Op), jnp.float32).at[0, :O].set(params["fc_b"])

    # ---- launch: xp streamed from HBM in double-buffered T-timestep chunks ----
    T = _chunk_len(S, target=32)
    NB = 2 if (Bp >= 16 and Bp % 16 == 0) else 1    # v7x: split batch over both TCs
    TB = Bp // NB
    unroll = min(T, 8)

    kernel = _make_kernel(S, T, TB, G, H2, unroll)
    grid_spec = pltpu.PrefetchScalarGridSpec(
        num_scalar_prefetch=0,
        grid=(NB,),
        in_specs=[
            pl.BlockSpec(memory_space=pl.ANY),                 # xp stays in HBM
            pl.BlockSpec((H2, G), lambda b: (0, 0)),           # whh (VMEM resident)
            pl.BlockSpec((H2, Op), lambda b: (0, 0)),          # fc weight
            pl.BlockSpec((1, Op), lambda b: (0, 0)),           # fc bias
        ],
        out_specs=pl.BlockSpec((TB, Op), lambda b: (b, 0)),
        scratch_shapes=[
            pltpu.VMEM((2 * T, TB, G), jnp.float32),           # double-buffered chunks
            pltpu.VMEM((TB, H2), jnp.float32),                 # h carry
            pltpu.VMEM((TB, H2), jnp.float32),                 # c carry
            pltpu.SemaphoreType.DMA((2,)),
        ],
    )
    out = pl.pallas_call(
        kernel,
        out_shape=jax.ShapeDtypeStruct((Bp, Op), jnp.float32),
        grid_spec=grid_spec,
        compiler_params=pltpu.CompilerParams(
            dimension_semantics=("parallel",),
            vmem_limit_bytes=32 * 1024 * 1024,                 # raise v5e's 16 MiB default
        ),
    )(xp, whh_gm, wfc, bfc)
    return out[:B, :O]


def bilstm_reference(x_ids, params):
    """Pure-JAX reference mirroring PyTorch nn.LSTM (bidirectional) + Linear."""
    embeds = jnp.take(params["embedding"], x_ids, axis=0)              # (S, B, E)
    S, B, _ = embeds.shape
    H = params["whh_f"].shape[1]

    def run(w_ih, w_hh, b_ih, b_hh, order):
        h = jnp.zeros((B, H), jnp.float32)
        c = jnp.zeros((B, H), jnp.float32)
        for t in order:
            gates = embeds[t] @ w_ih.T + b_ih + h @ w_hh.T + b_hh
            i = jax.nn.sigmoid(gates[:, 0:H])
            f = jax.nn.sigmoid(gates[:, H:2 * H])
            g = jnp.tanh(gates[:, 2 * H:3 * H])
            o = jax.nn.sigmoid(gates[:, 3 * H:4 * H])
            c = f * c + i * g
            h = o * jnp.tanh(c)
        return h

    h_f = run(params["wih_f"], params["whh_f"], params["bih_f"],
              params["bhh_f"], range(S))
    h_b = run(params["wih_b"], params["whh_b"], params["bih_b"],
              params["bhh_b"], range(S - 1, -1, -1))
    h_cat = jnp.concatenate([h_f, h_b], axis=1)                        # [fwd | bwd]
    return h_cat @ params["fc_w"].T + params["fc_b"]


def init_params(key, vocab_size, embedding_dim, hidden_dim, output_dim):
    V, E, H, O = vocab_size, embedding_dim, hidden_dim, output_dim
    ks = jax.random.split(key, 11)
    s = 0.1
    n = lambda k, shp: jax.random.normal(k, shp, jnp.float32) * s
    # PyTorch nn.LSTM layout: weight_ih (4H, E), weight_hh (4H, H), biases (4H,),
    # gate order [i, f, g, o]; fc weight (O, 2H), fc bias (O,).
    return {
        "embedding": n(ks[0], (V, E)),
        "wih_f": n(ks[1], (4 * H, E)), "whh_f": n(ks[2], (4 * H, H)),
        "bih_f": n(ks[3], (4 * H,)),   "bhh_f": n(ks[4], (4 * H,)),
        "wih_b": n(ks[5], (4 * H, E)), "whh_b": n(ks[6], (4 * H, H)),
        "bih_b": n(ks[7], (4 * H,)),   "bhh_b": n(ks[8], (4 * H,)),
        "fc_w": n(ks[9], (O, 2 * H)),  "fc_b": n(ks[10], (O,)),
    }


if __name__ == "__main__":
    vocab_size, embedding_dim, hidden_dim, output_dim = 32, 16, 32, 4
    seq_len, batch = 8, 2

    key = jax.random.PRNGKey(0)
    kp, kx = jax.random.split(key)
    params = init_params(kp, vocab_size, embedding_dim, hidden_dim, output_dim)
    x_ids = jax.random.randint(kx, (seq_len, batch), 0, vocab_size,
                               dtype=jnp.int32)

    out = jax.block_until_ready(bilstm_forward(x_ids, params))
    ref = bilstm_reference(x_ids, params)

    assert out.shape == (batch, output_dim)
    assert jnp.allclose(out, ref, atol=1e-4, rtol=1e-4), (out, ref)
    print("KERNEL_OK")
</pallas_src>

<mosaic_0001>
module attributes {stable_mosaic.version = 11 : i64} {
  func.func @kernel(%arg0: i32, %arg1: memref<8x8x512xf32, #tpu.memory_space<any>>, %arg2: memref<128x512xf32, #tpu.memory_space<vmem>>, %arg3: memref<128x128xf32, #tpu.memory_space<vmem>>, %arg4: memref<1x128xf32, #tpu.memory_space<vmem>>, %arg5: memref<8x128xf32, #tpu.memory_space<vmem>>, %arg6: memref<16x8x512xf32, #tpu.memory_space<vmem>>, %arg7: memref<8x128xf32, #tpu.memory_space<vmem>>, %arg8: memref<8x128xf32, #tpu.memory_space<vmem>>, %arg9: memref<2x!tpu.dma_semaphore, #tpu.memory_space<semaphore_mem>>) attributes {dimension_semantics = [#tpu.dimension_semantics<parallel>], iteration_bounds = array<i64: 1>, scalar_prefetch = 0 : i64, scratch_operands = 4 : i64, tpu.core_type = #tpu.core_type<tc>, window_params = [{}, {pipeline_mode = #tpu.pipeline_mode<synchronous>, transform_indices = @transform_1, window_bounds = array<i64: 128, 512>}, {pipeline_mode = #tpu.pipeline_mode<synchronous>, transform_indices = @transform_2, window_bounds = array<i64: 128, 128>}, {pipeline_mode = #tpu.pipeline_mode<synchronous>, transform_indices = @transform_3, window_bounds = array<i64: 1, 128>}, {transform_indices = @transform_4, window_bounds = array<i64: 8, 128>}]} {
    %c8_i32 = arith.constant 8 : i32
    %0 = arith.muli %arg0, %c8_i32 : i32
    %1 = tpu.assume_multiple %0, 8 : i32
    %c0 = arith.constant 0 : index
    %c0_0 = arith.constant 0 : index
    %2 = vector.load %arg2[%c0, %c0_0] : memref<128x512xf32, #tpu.memory_space<vmem>>, vector<128x512xf32>
    %c0_i32 = arith.constant 0 : i32
    %c0_i32_1 = arith.constant 0 : i32
    %c0_i32_2 = arith.constant 0 : i32
    %3 = tpu.memref_slice %arg1[%c0_i32_1, %1, %c0_i32_2] : memref<8x8x512xf32, #tpu.memory_space<any>> -> memref<8x8x512xf32, #tpu.memory_space<any>>
    %c0_i32_3 = arith.constant 0 : i32
    %c0_i32_4 = arith.constant 0 : i32
    %c0_i32_5 = arith.constant 0 : i32
    %4 = tpu.memref_slice %arg6[%c0_i32_3, %c0_i32_4, %c0_i32_5] : memref<16x8x512xf32, #tpu.memory_space<vmem>> -> memref<8x8x512xf32, #tpu.memory_space<vmem>>
    %5 = tpu.memref_slice %arg9[%c0_i32] : memref<2x!tpu.dma_semaphore, #tpu.memory_space<semaphore_mem>> -> memref<1x!tpu.dma_semaphore, #tpu.memory_space<semaphore_mem>>
    %6 = tpu.memref_squeeze %5 : memref<1x!tpu.dma_semaphore, #tpu.memory_space<semaphore_mem>> -> memref<!tpu.dma_semaphore, #tpu.memory_space<semaphore_mem>>
    tpu.enqueue_dma source(%3 : memref<8x8x512xf32, #tpu.memory_space<any>>) target(%4 : memref<8x8x512xf32, #tpu.memory_space<vmem>>) target_semaphore(%6 : memref<!tpu.dma_semaphore, #tpu.memory_space<semaphore_mem>>)
    %cst = arith.constant 0.000000e+00 : f32
    %7 = vector.broadcast %cst : f32 to vector<8x128xf32>
    %c0_6 = arith.constant 0 : index
    %c0_7 = arith.constant 0 : index
    %8 = vector.load %arg7[%c0_6, %c0_7] : memref<8x128xf32, #tpu.memory_space<vmem>>, vector<8x128xf32>
    tpu.vector_store %arg7[%c0_6, %c0_7], %7 {strides = array<i32>} : memref<8x128xf32, #tpu.memory_space<vmem>>, vector<8x128xf32>,
    %cst_8 = arith.constant 0.000000e+00 : f32
    %9 = vector.broadcast %cst_8 : f32 to vector<8x128xf32>
    %c0_9 = arith.constant 0 : index
    %c0_10 = arith.constant 0 : index
    %10 = vector.load %arg8[%c0_9, %c0_10] : memref<8x128xf32, #tpu.memory_space<vmem>>, vector<8x128xf32>
    tpu.vector_store %arg8[%c0_9, %c0_10], %9 {strides = array<i32>} : memref<8x128xf32, #tpu.memory_space<vmem>>, vector<8x128xf32>,
    %c0_i32_11 = arith.constant 0 : i32
    %c1_i32 = arith.constant 1 : i32
    %11 = arith.muli %c0_i32_11, %c1_i32 : i32
    %c0_i32_12 = arith.constant 0 : i32
    %12 = arith.addi %c0_i32_12, %11 : i32
    %c1_i32_13 = arith.constant 1 : i32
    %13 = arith.andi %12, %c1_i32_13 : i32
    %c0_i32_14 = arith.constant 0 : i32
    %c0_i32_15 = arith.constant 0 : i32
    %14 = tpu.memref_slice %arg1[%c0_i32_14, %1, %c0_i32_15] : memref<8x8x512xf32, #tpu.memory_space<any>> -> memref<8x8x512xf32, #tpu.memory_space<any>>
    %c0_i32_16 = arith.constant 0 : i32
    %c0_i32_17 = arith.constant 0 : i32
    %c0_i32_18 = arith.constant 0 : i32
    %15 = tpu.memref_slice %arg6[%c0_i32_16, %c0_i32_17, %c0_i32_18] : memref<16x8x512xf32, #tpu.memory_space<vmem>> -> memref<8x8x512xf32, #tpu.memory_space<vmem>>
    %16 = tpu.memref_slice %arg9[%13] : memref<2x!tpu.dma_semaphore, #tpu.memory_space<semaphore_mem>> -> memref<1x!tpu.dma_semaphore, #tpu.memory_space<semaphore_mem>>
    %17 = tpu.memref_squeeze %16 : memref<1x!tpu.dma_semaphore, #tpu.memory_space<semaphore_mem>> -> memref<!tpu.dma_semaphore, #tpu.memory_space<semaphore_mem>>
    tpu.wait_dma2 semaphore(%17 : memref<!tpu.dma_semaphore, #tpu.memory_space<semaphore_mem>>) src(%14 : memref<8x8x512xf32, #tpu.memory_space<any>>) dst(%15 : memref<8x8x512xf32, #tpu.memory_space<vmem>>)
    %c1_i32_19 = arith.constant 1 : i32
    %18 = arith.addi %12, %c1_i32_19 : i32
    %c1_i32_20 = arith.constant 1 : i32
    %19 = arith.cmpi slt, %18, %c1_i32_20 : i32
    %20 = arith.extui %19 : i1 to i32
    %c0_i32_21 = arith.constant 0 : i32
    %21 = arith.cmpi ne, %20, %c0_i32_21 : i32
    scf.if %21 {
      %c1_i32_140 = arith.constant 1 : i32
      %330 = arith.addi %12, %c1_i32_140 : i32
      %c1_i32_141 = arith.constant 1 : i32
      %331 = arith.subi %c1_i32_141, %13 : i32
      %c8_i32_142 = arith.constant 8 : i32
      %332 = arith.muli %330, %c8_i32_142 : i32
      %c8_i32_143 = arith.constant 8 : i32
      %333 = arith.muli %331, %c8_i32_143 : i32
      %c0_i32_144 = arith.constant 0 : i32
      %334 = tpu.memref_slice %arg1[%332, %1, %c0_i32_144] : memref<8x8x512xf32, #tpu.memory_space<any>> -> memref<8x8x512xf32, #tpu.memory_space<any>>
      %c0_i32_145 = arith.constant 0 : i32
      %c0_i32_146 = arith.constant 0 : i32
      %335 = tpu.memref_slice %arg6[%333, %c0_i32_145, %c0_i32_146] : memref<16x8x512xf32, #tpu.memory_space<vmem>> -> memref<8x8x512xf32, #tpu.memory_space<vmem>>
      %336 = tpu.memref_slice %arg9[%331] : memref<2x!tpu.dma_semaphore, #tpu.memory_space<semaphore_mem>> -> memref<1x!tpu.dma_semaphore, #tpu.memory_space<semaphore_mem>>
      %337 = tpu.memref_squeeze %336 : memref<1x!tpu.dma_semaphore, #tpu.memory_space<semaphore_mem>> -> memref<!tpu.dma_semaphore, #tpu.memory_space<semaphore_mem>>
      tpu.enqueue_dma source(%334 : memref<8x8x512xf32, #tpu.memory_space<any>>) target(%335 : memref<8x8x512xf32, #tpu.memory_space<vmem>>) target_semaphore(%337 : memref<!tpu.dma_semaphore, #tpu.memory_space<semaphore_mem>>)
    } else {
    }
    %c8_i32_22 = arith.constant 8 : i32
    %22 = arith.muli %13, %c8_i32_22 : i32
    %c0_23 = arith.constant 0 : index
    %c0_24 = arith.constant 0 : index
    %23 = vector.load %arg7[%c0_23, %c0_24] : memref<8x128xf32, #tpu.memory_space<vmem>>, vector<8x128xf32>
    %c0_25 = arith.constant 0 : index
    %c0_26 = arith.constant 0 : index
    %24 = vector.load %arg8[%c0_25, %c0_26] : memref<8x128xf32, #tpu.memory_space<vmem>>, vector<8x128xf32>
    %c0_i32_27 = arith.constant 0 : i32
    %25 = arith.addi %22, %c0_i32_27 : i32
    %26 = arith.index_cast %25 : i32 to index
    %c0_28 = arith.constant 0 : index
    %c0_29 = arith.constant 0 : index
    %27 = vector.load %arg6[%26, %c0_28, %c0_29] : memref<16x8x512xf32, #tpu.memory_space<vmem>>, vector<1x8x512xf32>
    %28 = vector.shape_cast %27 : vector<1x8x512xf32> to vector<8x512xf32>
    %cst_30 = arith.constant dense<0.000000e+00> : vector<8x512xf32>
    %29 = tpu.matmul %23, %2, %cst_30 {dimension_numbers = #tpu.dot_dimension_numbers<[1], [0], [0], [1], [0, 0, 1, 1], [], []>} : vector<8x128xf32>, vector<128x512xf32>, vector<8x512xf32> -> vector<8x512xf32>
    %30 = arith.addf %28, %29 : vector<8x512xf32>
    %31 = vector.extract_strided_slice %30 {offsets = [0, 0], sizes = [8, 128], strides = [1, 1]} : vector<8x512xf32> to vector<8x128xf32>
    %cst_31 = arith.constant 5.000000e-01 : f32
    %32 = vector.broadcast %cst_31 : f32 to vector<8x128xf32>
    %33 = arith.mulf %32, %31 : vector<8x128xf32>
    %34 = math.tanh %33 : vector<8x128xf32>
    %cst_32 = arith.constant 5.000000e-01 : f32
    %35 = vector.broadcast %cst_32 : f32 to vector<8x128xf32>
    %36 = arith.mulf %35, %34 : vector<8x128xf32>
    %cst_33 = arith.constant 5.000000e-01 : f32
    %37 = vector.broadcast %cst_33 : f32 to vector<8x128xf32>
    %38 = arith.addf %36, %37 : vector<8x128xf32>
    %39 = vector.extract_strided_slice %30 {offsets = [0, 128], sizes = [8, 128], strides = [1, 1]} : vector<8x512xf32> to vector<8x128xf32>
    %cst_34 = arith.constant 5.000000e-01 : f32
    %40 = vector.broadcast %cst_34 : f32 to vector<8x128xf32>
    %41 = arith.mulf %40, %39 : vector<8x128xf32>
    %42 = math.tanh %41 : vector<8x128xf32>
    %cst_35 = arith.constant 5.000000e-01 : f32
    %43 = vector.broadcast %cst_35 : f32 to vector<8x128xf32>
    %44 = arith.mulf %43, %42 : vector<8x128xf32>
    %cst_36 = arith.constant 5.000000e-01 : f32
    %45 = vector.broadcast %cst_36 : f32 to vector<8x128xf32>
    %46 = arith.addf %44, %45 : vector<8x128xf32>
    %47 = vector.extract_strided_slice %30 {offsets = [0, 256], sizes = [8, 128], strides = [1, 1]} : vector<8x512xf32> to vector<8x128xf32>
    %48 = math.tanh %47 : vector<8x128xf32>
    %49 = vector.extract_strided_slice %30 {offsets = [0, 384], sizes = [8, 128], strides = [1, 1]} : vector<8x512xf32> to vector<8x128xf32>
    %cst_37 = arith.constant 5.000000e-01 : f32
    %50 = vector.broadcast %cst_37 : f32 to vector<8x128xf32>
    %51 = arith.mulf %50, %49 : vector<8x128xf32>
    %52 = math.tanh %51 : vector<8x128xf32>
    %cst_38 = arith.constant 5.000000e-01 : f32
    %53 = vector.broadcast %cst_38 : f32 to vector<8x128xf32>
    %54 = arith.mulf %53, %52 : vector<8x128xf32>
    %cst_39 = arith.constant 5.000000e-01 : f32
    %55 = vector.broadcast %cst_39 : f32 to vector<8x128xf32>
    %56 = arith.addf %54, %55 : vector<8x128xf32>
    %57 = arith.mulf %46, %24 : vector<8x128xf32>
    %58 = arith.mulf %38, %48 : vector<8x128xf32>
    %59 = arith.addf %57, %58 : vector<8x128xf32>
    %60 = math.tanh %59 : vector<8x128xf32>
    %61 = arith.mulf %56, %60 : vector<8x128xf32>
    %c1_i32_40 = arith.constant 1 : i32
    %62 = arith.addi %22, %c1_i32_40 : i32
    %63 = arith.index_cast %62 : i32 to index
    %c0_41 = arith.constant 0 : index
    %c0_42 = arith.constant 0 : index
    %64 = vector.load %arg6[%63, %c0_41, %c0_42] : memref<16x8x512xf32, #tpu.memory_space<vmem>>, vector<1x8x512xf32>
    %65 = vector.shape_cast %64 : vector<1x8x512xf32> to vector<8x512xf32>
    %cst_43 = arith.constant dense<0.000000e+00> : vector<8x512xf32>
    %66 = tpu.matmul %61, %2, %cst_43 {dimension_numbers = #tpu.dot_dimension_numbers<[1], [0], [0], [1], [0, 0, 1, 1], [], []>} : vector<8x128xf32>, vector<128x512xf32>, vector<8x512xf32> -> vector<8x512xf32>
    %67 = arith.addf %65, %66 : vector<8x512xf32>
    %68 = vector.extract_strided_slice %67 {offsets = [0, 0], sizes = [8, 128], strides = [1, 1]} : vector<8x512xf32> to vector<8x128xf32>
    %cst_44 = arith.constant 5.000000e-01 : f32
    %69 = vector.broadcast %cst_44 : f32 to vector<8x128xf32>
    %70 = arith.mulf %69, %68 : vector<8x128xf32>
    %71 = math.tanh %70 : vector<8x128xf32>
    %cst_45 = arith.constant 5.000000e-01 : f32
    %72 = vector.broadcast %cst_45 : f32 to vector<8x128xf32>
    %73 = arith.mulf %72, %71 : vector<8x128xf32>
    %cst_46 = arith.constant 5.000000e-01 : f32
    %74 = vector.broadcast %cst_46 : f32 to vector<8x128xf32>
    %75 = arith.addf %73, %74 : vector<8x128xf32>
    %76 = vector.extract_strided_slice %67 {offsets = [0, 128], sizes = [8, 128], strides = [1, 1]} : vector<8x512xf32> to vector<8x128xf32>
    %cst_47 = arith.constant 5.000000e-01 : f32
    %77 = vector.broadcast %cst_47 : f32 to vector<8x128xf32>
    %78 = arith.mulf %77, %76 : vector<8x128xf32>
    %79 = math.tanh %78 : vector<8x128xf32>
    %cst_48 = arith.constant 5.000000e-01 : f32
    %80 = vector.broadcast %cst_48 : f32 to vector<8x128xf32>
    %81 = arith.mulf %80, %79 : vector<8x128xf32>
    %cst_49 = arith.constant 5.000000e-01 : f32
    %82 = vector.broadcast %cst_49 : f32 to vector<8x128xf32>
    %83 = arith.addf %81, %82 : vector<8x128xf32>
    %84 = vector.extract_strided_slice %67 {offsets = [0, 256], sizes = [8, 128], strides = [1, 1]} : vector<8x512xf32> to vector<8x128xf32>
    %85 = math.tanh %84 : vector<8x128xf32>
    %86 = vector.extract_strided_slice %67 {offsets = [0, 384], sizes = [8, 128], strides = [1, 1]} : vector<8x512xf32> to vector<8x128xf32>
    %cst_50 = arith.constant 5.000000e-01 : f32
    %87 = vector.broadcast %cst_50 : f32 to vector<8x128xf32>
    %88 = arith.mulf %87, %86 : vector<8x128xf32>
    %89 = math.tanh %88 : vector<8x128xf32>
    %cst_51 = arith.constant 5.000000e-01 : f32
    %90 = vector.broadcast %cst_51 : f32 to vector<8x128xf32>
    %91 = arith.mulf %90, %89 : vector<8x128xf32>
    %cst_52 = arith.constant 5.000000e-01 : f32
    %92 = vector.broadcast %cst_52 : f32 to vector<8x128xf32>
    %93 = arith.addf %91, %92 : vector<8x128xf32>
    %94 = arith.mulf %83, %59 : vector<8x128xf32>
    %95 = arith.mulf %75, %85 : vector<8x128xf32>
    %96 = arith.addf %94, %95 : vector<8x128xf32>
    %97 = math.tanh %96 : vector<8x128xf32>
    %98 = arith.mulf %93, %97 : vector<8x128xf32>
    %c2_i32 = arith.constant 2 : i32
    %99 = arith.addi %22, %c2_i32 : i32
    %100 = arith.index_cast %99 : i32 to index
    %c0_53 = arith.constant 0 : index
    %c0_54 = arith.constant 0 : index
    %101 = vector.load %arg6[%100, %c0_53, %c0_54] : memref<16x8x512xf32, #tpu.memory_space<vmem>>, vector<1x8x512xf32>
    %102 = vector.shape_cast %101 : vector<1x8x512xf32> to vector<8x512xf32>
    %cst_55 = arith.constant dense<0.000000e+00> : vector<8x512xf32>
    %103 = tpu.matmul %98, %2, %cst_55 {dimension_numbers = #tpu.dot_dimension_numbers<[1], [0], [0], [1], [0, 0, 1, 1], [], []>} : vector<8x128xf32>, vector<128x512xf32>, vector<8x512xf32> -> vector<8x512xf32>
    %104 = arith.addf %102, %103 : vector<8x512xf32>
    %105 = vector.extract_strided_slice %104 {offsets = [0, 0], sizes = [8, 128], strides = [1, 1]} : vector<8x512xf32> to vector<8x128xf32>
    %cst_56 = arith.constant 5.000000e-01 : f32
    %106 = vector.broadcast %cst_56 : f32 to vector<8x128xf32>
    %107 = arith.mulf %106, %105 : vector<8x128xf32>
    %108 = math.tanh %107 : vector<8x128xf32>
    %cst_57 = arith.constant 5.000000e-01 : f32
    %109 = vector.broadcast %cst_57 : f32 to vector<8x128xf32>
    %110 = arith.mulf %109, %108 : vector<8x128xf32>
    %cst_58 = arith.constant 5.000000e-01 : f32
    %111 = vector.broadcast %cst_58 : f32 to vector<8x128xf32>
    %112 = arith.addf %110, %111 : vector<8x128xf32>
    %113 = vector.extract_strided_slice %104 {offsets = [0, 128], sizes = [8, 128], strides = [1, 1]} : vector<8x512xf32> to vector<8x128xf32>
    %cst_59 = arith.constant 5.000000e-01 : f32
    %114 = vector.broadcast %cst_59 : f32 to vector<8x128xf32>
    %115 = arith.mulf %114, %113 : vector<8x128xf32>
    %116 = math.tanh %115 : vector<8x128xf32>
    %cst_60 = arith.constant 5.000000e-01 : f32
    %117 = vector.broadcast %cst_60 : f32 to vector<8x128xf32>
    %118 = arith.mulf %117, %116 : vector<8x128xf32>
    %cst_61 = arith.constant 5.000000e-01 : f32
    %119 = vector.broadcast %cst_61 : f32 to vector<8x128xf32>
    %120 = arith.addf %118, %119 : vector<8x128xf32>
    %121 = vector.extract_strided_slice %104 {offsets = [0, 256], sizes = [8, 128], strides = [1, 1]} : vector<8x512xf32> to vector<8x128xf32>
    %122 = math.tanh %121 : vector<8x128xf32>
    %123 = vector.extract_strided_slice %104 {offsets = [0, 384], sizes = [8, 128], strides = [1, 1]} : vector<8x512xf32> to vector<8x128xf32>
    %cst_62 = arith.constant 5.000000e-01 : f32
    %124 = vector.broadcast %cst_62 : f32 to vector<8x128xf32>
    %125 = arith.mulf %124, %123 : vector<8x128xf32>
    %126 = math.tanh %125 : vector<8x128xf32>
    %cst_63 = arith.constant 5.000000e-01 : f32
    %127 = vector.broadcast %cst_63 : f32 to vector<8x128xf32>
    %128 = arith.mulf %127, %126 : vector<8x128xf32>
    %cst_64 = arith.constant 5.000000e-01 : f32
    %129 = vector.broadcast %cst_64 : f32 to vector<8x128xf32>
    %130 = arith.addf %128, %129 : vector<8x128xf32>
    %131 = arith.mulf %120, %96 : vector<8x128xf32>
    %132 = arith.mulf %112, %122 : vector<8x128xf32>
    %133 = arith.addf %131, %132 : vector<8x128xf32>
    %134 = math.tanh %133 : vector<8x128xf32>
    %135 = arith.mulf %130, %134 : vector<8x128xf32>
    %c3_i32 = arith.constant 3 : i32
    %136 = arith.addi %22, %c3_i32 : i32
    %137 = arith.index_cast %136 : i32 to index
    %c0_65 = arith.constant 0 : index
    %c0_66 = arith.constant 0 : index
    %138 = vector.load %arg6[%137, %c0_65, %c0_66] : memref<16x8x512xf32, #tpu.memory_space<vmem>>, vector<1x8x512xf32>
    %139 = vector.shape_cast %138 : vector<1x8x512xf32> to vector<8x512xf32>
    %cst_67 = arith.constant dense<0.000000e+00> : vector<8x512xf32>
    %140 = tpu.matmul %135, %2, %cst_67 {dimension_numbers = #tpu.dot_dimension_numbers<[1], [0], [0], [1], [0, 0, 1, 1], [], []>} : vector<8x128xf32>, vector<128x512xf32>, vector<8x512xf32> -> vector<8x512xf32>
    %141 = arith.addf %139, %140 : vector<8x512xf32>
    %142 = vector.extract_strided_slice %141 {offsets = [0, 0], sizes = [8, 128], strides = [1, 1]} : vector<8x512xf32> to vector<8x128xf32>
    %cst_68 = arith.constant 5.000000e-01 : f32
    %143 = vector.broadcast %cst_68 : f32 to vector<8x128xf32>
    %144 = arith.mulf %143, %142 : vector<8x128xf32>
    %145 = math.tanh %144 : vector<8x128xf32>
    %cst_69 = arith.constant 5.000000e-01 : f32
    %146 = vector.broadcast %cst_69 : f32 to vector<8x128xf32>
    %147 = arith.mulf %146, %145 : vector<8x128xf32>
    %cst_70 = arith.constant 5.000000e-01 : f32
    %148 = vector.broadcast %cst_70 : f32 to vector<8x128xf32>
    %149 = arith.addf %147, %148 : vector<8x128xf32>
    %150 = vector.extract_strided_slice %141 {offsets = [0, 128], sizes = [8, 128], strides = [1, 1]} : vector<8x512xf32> to vector<8x128xf32>
    %cst_71 = arith.constant 5.000000e-01 : f32
    %151 = vector.broadcast %cst_71 : f32 to vector<8x128xf32>
    %152 = arith.mulf %151, %150 : vector<8x128xf32>
    %153 = math.tanh %152 : vector<8x128xf32>
    %cst_72 = arith.constant 5.000000e-01 : f32
    %154 = vector.broadcast %cst_72 : f32 to vector<8x128xf32>
    %155 = arith.mulf %154, %153 : vector<8x128xf32>
    %cst_73 = arith.constant 5.000000e-01 : f32
    %156 = vector.broadcast %cst_73 : f32 to vector<8x128xf32>
    %157 = arith.addf %155, %156 : vector<8x128xf32>
    %158 = vector.extract_strided_slice %141 {offsets = [0, 256], sizes = [8, 128], strides = [1, 1]} : vector<8x512xf32> to vector<8x128xf32>
    %159 = math.tanh %158 : vector<8x128xf32>
    %160 = vector.extract_strided_slice %141 {offsets = [0, 384], sizes = [8, 128], strides = [1, 1]} : vector<8x512xf32> to vector<8x128xf32>
    %cst_74 = arith.constant 5.000000e-01 : f32
    %161 = vector.broadcast %cst_74 : f32 to vector<8x128xf32>
    %162 = arith.mulf %161, %160 : vector<8x128xf32>
    %163 = math.tanh %162 : vector<8x128xf32>
    %cst_75 = arith.constant 5.000000e-01 : f32
    %164 = vector.broadcast %cst_75 : f32 to vector<8x128xf32>
    %165 = arith.mulf %164, %163 : vector<8x128xf32>
    %cst_76 = arith.constant 5.000000e-01 : f32
    %166 = vector.broadcast %cst_76 : f32 to vector<8x128xf32>
    %167 = arith.addf %165, %166 : vector<8x128xf32>
    %168 = arith.mulf %157, %133 : vector<8x128xf32>
    %169 = arith.mulf %149, %159 : vector<8x128xf32>
    %170 = arith.addf %168, %169 : vector<8x128xf32>
    %171 = math.tanh %170 : vector<8x128xf32>
    %172 = arith.mulf %167, %171 : vector<8x128xf32>
    %c4_i32 = arith.constant 4 : i32
    %173 = arith.addi %22, %c4_i32 : i32
    %174 = arith.index_cast %173 : i32 to index
    %c0_77 = arith.constant 0 : index
    %c0_78 = arith.constant 0 : index
    %175 = vector.load %arg6[%174, %c0_77, %c0_78] : memref<16x8x512xf32, #tpu.memory_space<vmem>>, vector<1x8x512xf32>
    %176 = vector.shape_cast %175 : vector<1x8x512xf32> to vector<8x512xf32>
    %cst_79 = arith.constant dense<0.000000e+00> : vector<8x512xf32>
    %177 = tpu.matmul %172, %2, %cst_79 {dimension_numbers = #tpu.dot_dimension_numbers<[1], [0], [0], [1], [0, 0, 1, 1], [], []>} : vector<8x128xf32>, vector<128x512xf32>, vector<8x512xf32> -> vector<8x512xf32>
    %178 = arith.addf %176, %177 : vector<8x512xf32>
    %179 = vector.extract_strided_slice %178 {offsets = [0, 0], sizes = [8, 128], strides = [1, 1]} : vector<8x512xf32> to vector<8x128xf32>
    %cst_80 = arith.constant 5.000000e-01 : f32
    %180 = vector.broadcast %cst_80 : f32 to vector<8x128xf32>
    %181 = arith.mulf %180, %179 : vector<8x128xf32>
    %182 = math.tanh %181 : vector<8x128xf32>
    %cst_81 = arith.constant 5.000000e-01 : f32
    %183 = vector.broadcast %cst_81 : f32 to vector<8x128xf32>
    %184 = arith.mulf %183, %182 : vector<8x128xf32>
    %cst_82 = arith.constant 5.000000e-01 : f32
    %185 = vector.broadcast %cst_82 : f32 to vector<8x128xf32>
    %186 = arith.addf %184, %185 : vector<8x128xf32>
    %187 = vector.extract_strided_slice %178 {offsets = [0, 128], sizes = [8, 128], strides = [1, 1]} : vector<8x512xf32> to vector<8x128xf32>
    %cst_83 = arith.constant 5.000000e-01 : f32
    %188 = vector.broadcast %cst_83 : f32 to vector<8x128xf32>
    %189 = arith.mulf %188, %187 : vector<8x128xf32>
    %190 = math.tanh %189 : vector<8x128xf32>
    %cst_84 = arith.constant 5.000000e-01 : f32
    %191 = vector.broadcast %cst_84 : f32 to vector<8x128xf32>
    %192 = arith.mulf %191, %190 : vector<8x128xf32>
    %cst_85 = arith.constant 5.000000e-01 : f32
    %193 = vector.broadcast %cst_85 : f32 to vector<8x128xf32>
    %194 = arith.addf %192, %193 : vector<8x128xf32>
    %195 = vector.extract_strided_slice %178 {offsets = [0, 256], sizes = [8, 128], strides = [1, 1]} : vector<8x512xf32> to vector<8x128xf32>
    %196 = math.tanh %195 : vector<8x128xf32>
    %197 = vector.extract_strided_slice %178 {offsets = [0, 384], sizes = [8, 128], strides = [1, 1]} : vector<8x512xf32> to vector<8x128xf32>
    %cst_86 = arith.constant 5.000000e-01 : f32
    %198 = vector.broadcast %cst_86 : f32 to vector<8x128xf32>
    %199 = arith.mulf %198, %197 : vector<8x128xf32>
    %200 = math.tanh %199 : vector<8x128xf32>
    %cst_87 = arith.constant 5.000000e-01 : f32
    %201 = vector.broadcast %cst_87 : f32 to vector<8x128xf32>
    %202 = arith.mulf %201, %200 : vector<8x128xf32>
    %cst_88 = arith.constant 5.000000e-01 : f32
    %203 = vector.broadcast %cst_88 : f32 to vector<8x128xf32>
    %204 = arith.addf %202, %203 : vector<8x128xf32>
    %205 = arith.mulf %194, %170 : vector<8x128xf32>
    %206 = arith.mulf %186, %196 : vector<8x128xf32>
    %207 = arith.addf %205, %206 : vector<8x128xf32>
    %208 = math.tanh %207 : vector<8x128xf32>
    %209 = arith.mulf %204, %208 : vector<8x128xf32>
    %c5_i32 = arith.constant 5 : i32
    %210 = arith.addi %22, %c5_i32 : i32
    %211 = arith.index_cast %210 : i32 to index
    %c0_89 = arith.constant 0 : index
    %c0_90 = arith.constant 0 : index
    %212 = vector.load %arg6[%211, %c0_89, %c0_90] : memref<16x8x512xf32, #tpu.memory_space<vmem>>, vector<1x8x512xf32>
    %213 = vector.shape_cast %212 : vector<1x8x512xf32> to vector<8x512xf32>
    %cst_91 = arith.constant dense<0.000000e+00> : vector<8x512xf32>
    %214 = tpu.matmul %209, %2, %cst_91 {dimension_numbers = #tpu.dot_dimension_numbers<[1], [0], [0], [1], [0, 0, 1, 1], [], []>} : vector<8x128xf32>, vector<128x512xf32>, vector<8x512xf32> -> vector<8x512xf32>
    %215 = arith.addf %213, %214 : vector<8x512xf32>
    %216 = vector.extract_strided_slice %215 {offsets = [0, 0], sizes = [8, 128], strides = [1, 1]} : vector<8x512xf32> to vector<8x128xf32>
    %cst_92 = arith.constant 5.000000e-01 : f32
    %217 = vector.broadcast %cst_92 : f32 to vector<8x128xf32>
    %218 = arith.mulf %217, %216 : vector<8x128xf32>
    %219 = math.tanh %218 : vector<8x128xf32>
    %cst_93 = arith.constant 5.000000e-01 : f32
    %220 = vector.broadcast %cst_93 : f32 to vector<8x128xf32>
    %221 = arith.mulf %220, %219 : vector<8x128xf32>
    %cst_94 = arith.constant 5.000000e-01 : f32
    %222 = vector.broadcast %cst_94 : f32 to vector<8x128xf32>
    %223 = arith.addf %221, %222 : vector<8x128xf32>
    %224 = vector.extract_strided_slice %215 {offsets = [0, 128], sizes = [8, 128], strides = [1, 1]} : vector<8x512xf32> to vector<8x128xf32>
    %cst_95 = arith.constant 5.000000e-01 : f32
    %225 = vector.broadcast %cst_95 : f32 to vector<8x128xf32>
    %226 = arith.mulf %225, %224 : vector<8x128xf32>
    %227 = math.tanh %226 : vector<8x128xf32>
    %cst_96 = arith.constant 5.000000e-01 : f32
    %228 = vector.broadcast %cst_96 : f32 to vector<8x128xf32>
    %229 = arith.mulf %228, %227 : vector<8x128xf32>
    %cst_97 = arith.constant 5.000000e-01 : f32
    %230 = vector.broadcast %cst_97 : f32 to vector<8x128xf32>
    %231 = arith.addf %229, %230 : vector<8x128xf32>
    %232 = vector.extract_strided_slice %215 {offsets = [0, 256], sizes = [8, 128], strides = [1, 1]} : vector<8x512xf32> to vector<8x128xf32>
    %233 = math.tanh %232 : vector<8x128xf32>
    %234 = vector.extract_strided_slice %215 {offsets = [0, 384], sizes = [8, 128], strides = [1, 1]} : vector<8x512xf32> to vector<8x128xf32>
    %cst_98 = arith.constant 5.000000e-01 : f32
    %235 = vector.broadcast %cst_98 : f32 to vector<8x128xf32>
    %236 = arith.mulf %235, %234 : vector<8x128xf32>
    %237 = math.tanh %236 : vector<8x128xf32>
    %cst_99 = arith.constant 5.000000e-01 : f32
    %238 = vector.broadcast %cst_99 : f32 to vector<8x128xf32>
    %239 = arith.mulf %238, %237 : vector<8x128xf32>
    %cst_100 = arith.constant 5.000000e-01 : f32
    %240 = vector.broadcast %cst_100 : f32 to vector<8x128xf32>
    %241 = arith.addf %239, %240 : vector<8x128xf32>
    %242 = arith.mulf %231, %207 : vector<8x128xf32>
    %243 = arith.mulf %223, %233 : vector<8x128xf32>
    %244 = arith.addf %242, %243 : vector<8x128xf32>
    %245 = math.tanh %244 : vector<8x128xf32>
    %246 = arith.mulf %241, %245 : vector<8x128xf32>
    %c6_i32 = arith.constant 6 : i32
    %247 = arith.addi %22, %c6_i32 : i32
    %248 = arith.index_cast %247 : i32 to index
    %c0_101 = arith.constant 0 : index
    %c0_102 = arith.constant 0 : index
    %249 = vector.load %arg6[%248, %c0_101, %c0_102] : memref<16x8x512xf32, #tpu.memory_space<vmem>>, vector<1x8x512xf32>
    %250 = vector.shape_cast %249 : vector<1x8x512xf32> to vector<8x512xf32>
    %cst_103 = arith.constant dense<0.000000e+00> : vector<8x512xf32>
    %251 = tpu.matmul %246, %2, %cst_103 {dimension_numbers = #tpu.dot_dimension_numbers<[1], [0], [0], [1], [0, 0, 1, 1], [], []>} : vector<8x128xf32>, vector<128x512xf32>, vector<8x512xf32> -> vector<8x512xf32>
    %252 = arith.addf %250, %251 : vector<8x512xf32>
    %253 = vector.extract_strided_slice %252 {offsets = [0, 0], sizes = [8, 128], strides = [1, 1]} : vector<8x512xf32> to vector<8x128xf32>
    %cst_104 = arith.constant 5.000000e-01 : f32
    %254 = vector.broadcast %cst_104 : f32 to vector<8x128xf32>
    %255 = arith.mulf %254, %253 : vector<8x128xf32>
    %256 = math.tanh %255 : vector<8x128xf32>
    %cst_105 = arith.constant 5.000000e-01 : f32
    %257 = vector.broadcast %cst_105 : f32 to vector<8x128xf32>
    %258 = arith.mulf %257, %256 : vector<8x128xf32>
    %cst_106 = arith.constant 5.000000e-01 : f32
    %259 = vector.broadcast %cst_106 : f32 to vector<8x128xf32>
    %260 = arith.addf %258, %259 : vector<8x128xf32>
    %261 = vector.extract_strided_slice %252 {offsets = [0, 128], sizes = [8, 128], strides = [1, 1]} : vector<8x512xf32> to vector<8x128xf32>
    %cst_107 = arith.constant 5.000000e-01 : f32
    %262 = vector.broadcast %cst_107 : f32 to vector<8x128xf32>
    %263 = arith.mulf %262, %261 : vector<8x128xf32>
    %264 = math.tanh %263 : vector<8x128xf32>
    %cst_108 = arith.constant 5.000000e-01 : f32
    %265 = vector.broadcast %cst_108 : f32 to vector<8x128xf32>
    %266 = arith.mulf %265, %264 : vector<8x128xf32>
    %cst_109 = arith.constant 5.000000e-01 : f32
    %267 = vector.broadcast %cst_109 : f32 to vector<8x128xf32>
    %268 = arith.addf %266, %267 : vector<8x128xf32>
    %269 = vector.extract_strided_slice %252 {offsets = [0, 256], sizes = [8, 128], strides = [1, 1]} : vector<8x512xf32> to vector<8x128xf32>
    %270 = math.tanh %269 : vector<8x128xf32>
    %271 = vector.extract_strided_slice %252 {offsets = [0, 384], sizes = [8, 128], strides = [1, 1]} : vector<8x512xf32> to vector<8x128xf32>
    %cst_110 = arith.constant 5.000000e-01 : f32
    %272 = vector.broadcast %cst_110 : f32 to vector<8x128xf32>
    %273 = arith.mulf %272, %271 : vector<8x128xf32>
    %274 = math.tanh %273 : vector<8x128xf32>
    %cst_111 = arith.constant 5.000000e-01 : f32
    %275 = vector.broadcast %cst_111 : f32 to vector<8x128xf32>
    %276 = arith.mulf %275, %274 : vector<8x128xf32>
    %cst_112 = arith.constant 5.000000e-01 : f32
    %277 = vector.broadcast %cst_112 : f32 to vector<8x128xf32>
    %278 = arith.addf %276, %277 : vector<8x128xf32>
    %279 = arith.mulf %268, %244 : vector<8x128xf32>
    %280 = arith.mulf %260, %270 : vector<8x128xf32>
    %281 = arith.addf %279, %280 : vector<8x128xf32>
    %282 = math.tanh %281 : vector<8x128xf32>
    %283 = arith.mulf %278, %282 : vector<8x128xf32>
    %c7_i32 = arith.constant 7 : i32
    %284 = arith.addi %22, %c7_i32 : i32
    %285 = arith.index_cast %284 : i32 to index
    %c0_113 = arith.constant 0 : index
    %c0_114 = arith.constant 0 : index
    %286 = vector.load %arg6[%285, %c0_113, %c0_114] : memref<16x8x512xf32, #tpu.memory_space<vmem>>, vector<1x8x512xf32>
    %287 = vector.shape_cast %286 : vector<1x8x512xf32> to vector<8x512xf32>
    %cst_115 = arith.constant dense<0.000000e+00> : vector<8x512xf32>
    %288 = tpu.matmul %283, %2, %cst_115 {dimension_numbers = #tpu.dot_dimension_numbers<[1], [0], [0], [1], [0, 0, 1, 1], [], []>} : vector<8x128xf32>, vector<128x512xf32>, vector<8x512xf32> -> vector<8x512xf32>
    %289 = arith.addf %287, %288 : vector<8x512xf32>
    %290 = vector.extract_strided_slice %289 {offsets = [0, 0], sizes = [8, 128], strides = [1, 1]} : vector<8x512xf32> to vector<8x128xf32>
    %cst_116 = arith.constant 5.000000e-01 : f32
    %291 = vector.broadcast %cst_116 : f32 to vector<8x128xf32>
    %292 = arith.mulf %291, %290 : vector<8x128xf32>
    %293 = math.tanh %292 : vector<8x128xf32>
    %cst_117 = arith.constant 5.000000e-01 : f32
    %294 = vector.broadcast %cst_117 : f32 to vector<8x128xf32>
    %295 = arith.mulf %294, %293 : vector<8x128xf32>
    %cst_118 = arith.constant 5.000000e-01 : f32
    %296 = vector.broadcast %cst_118 : f32 to vector<8x128xf32>
    %297 = arith.addf %295, %296 : vector<8x128xf32>
    %298 = vector.extract_strided_slice %289 {offsets = [0, 128], sizes = [8, 128], strides = [1, 1]} : vector<8x512xf32> to vector<8x128xf32>
    %cst_119 = arith.constant 5.000000e-01 : f32
    %299 = vector.broadcast %cst_119 : f32 to vector<8x128xf32>
    %300 = arith.mulf %299, %298 : vector<8x128xf32>
    %301 = math.tanh %300 : vector<8x128xf32>
    %cst_120 = arith.constant 5.000000e-01 : f32
    %302 = vector.broadcast %cst_120 : f32 to vector<8x128xf32>
    %303 = arith.mulf %302, %301 : vector<8x128xf32>
    %cst_121 = arith.constant 5.000000e-01 : f32
    %304 = vector.broadcast %cst_121 : f32 to vector<8x128xf32>
    %305 = arith.addf %303, %304 : vector<8x128xf32>
    %306 = vector.extract_strided_slice %289 {offsets = [0, 256], sizes = [8, 128], strides = [1, 1]} : vector<8x512xf32> to vector<8x128xf32>
    %307 = math.tanh %306 : vector<8x128xf32>
    %308 = vector.extract_strided_slice %289 {offsets = [0, 384], sizes = [8, 128], strides = [1, 1]} : vector<8x512xf32> to vector<8x128xf32>
    %cst_122 = arith.constant 5.000000e-01 : f32
    %309 = vector.broadcast %cst_122 : f32 to vector<8x128xf32>
    %310 = arith.mulf %309, %308 : vector<8x128xf32>
    %311 = math.tanh %310 : vector<8x128xf32>
    %cst_123 = arith.constant 5.000000e-01 : f32
    %312 = vector.broadcast %cst_123 : f32 to vector<8x128xf32>
    %313 = arith.mulf %312, %311 : vector<8x128xf32>
    %cst_124 = arith.constant 5.000000e-01 : f32
    %314 = vector.broadcast %cst_124 : f32 to vector<8x128xf32>
    %315 = arith.addf %313, %314 : vector<8x128xf32>
    %316 = arith.mulf %305, %281 : vector<8x128xf32>
    %317 = arith.mulf %297, %307 : vector<8x128xf32>
    %318 = arith.addf %316, %317 : vector<8x128xf32>
    %319 = math.tanh %318 : vector<8x128xf32>
    %320 = arith.mulf %315, %319 : vector<8x128xf32>
    %c8_i32_125 = arith.constant 8 : i32
    %c0_126 = arith.constant 0 : index
    %c0_127 = arith.constant 0 : index
    %321 = vector.load %arg7[%c0_126, %c0_127] : memref<8x128xf32, #tpu.memory_space<vmem>>, vector<8x128xf32>
    tpu.vector_store %arg7[%c0_126, %c0_127], %320 {strides = array<i32>} : memref<8x128xf32, #tpu.memory_space<vmem>>, vector<8x128xf32>,
    %c0_128 = arith.constant 0 : index
    %c0_129 = arith.constant 0 : index
    %322 = vector.load %arg8[%c0_128, %c0_129] : memref<8x128xf32, #tpu.memory_space<vmem>>, vector<8x128xf32>
    tpu.vector_store %arg8[%c0_128, %c0_129], %318 {strides = array<i32>} : memref<8x128xf32, #tpu.memory_space<vmem>>, vector<8x128xf32>,
    %c1_i32_130 = arith.constant 1 : i32
    %c0_131 = arith.constant 0 : index
    %c0_132 = arith.constant 0 : index
    %323 = vector.load %arg7[%c0_131, %c0_132] : memref<8x128xf32, #tpu.memory_space<vmem>>, vector<8x128xf32>
    %c0_133 = arith.constant 0 : index
    %c0_134 = arith.constant 0 : index
    %324 = vector.load %arg3[%c0_133, %c0_134] : memref<128x128xf32, #tpu.memory_space<vmem>>, vector<128x128xf32>
    %cst_135 = arith.constant dense<0.000000e+00> : vector<8x128xf32>
    %325 = tpu.matmul %323, %324, %cst_135 {dimension_numbers = #tpu.dot_dimension_numbers<[1], [0], [0], [1], [0, 0, 1, 1], [], []>} : vector<8x128xf32>, vector<128x128xf32>, vector<8x128xf32> -> vector<8x128xf32>
    %c0_136 = arith.constant 0 : index
    %c0_137 = arith.constant 0 : index
    %326 = vector.load %arg4[%c0_136, %c0_137] : memref<1x128xf32, #tpu.memory_space<vmem>>, vector<1x128xf32>
    %327 = vector.broadcast %326 : vector<1x128xf32> to vector<8x128xf32>
    %328 = arith.addf %325, %327 : vector<8x128xf32>
    %c0_138 = arith.constant 0 : index
    %c0_139 = arith.constant 0 : index
    %329 = vector.load %arg5[%c0_138, %c0_139] : memref<8x128xf32, #tpu.memory_space<vmem>>, vector<8x128xf32>
    tpu.vector_store %arg5[%c0_138, %c0_139], %328 {strides = array<i32>} : memref<8x128xf32, #tpu.memory_space<vmem>>, vector<8x128xf32>,
    return
  }
  func.func @transform_1(%arg0: i32) -> (i32, i32) {
    %c0_i32 = arith.constant 0 : i32
    %c0_i32_0 = arith.constant 0 : i32
    %c0_i32_1 = arith.constant 0 : i32
    return %c0_i32, %c0_i32_0 : i32, i32
  }
  func.func @transform_2(%arg0: i32) -> (i32, i32) {
    %c0_i32 = arith.constant 0 : i32
    %c0_i32_0 = arith.constant 0 : i32
    %c0_i32_1 = arith.constant 0 : i32
    return %c0_i32, %c0_i32_0 : i32, i32
  }
  func.func @transform_3(%arg0: i32) -> (i32, i32) {
    %c0_i32 = arith.constant 0 : i32
    %c0_i32_0 = arith.constant 0 : i32
    %c0_i32_1 = arith.constant 0 : i32
    return %c0_i32, %c0_i32_0 : i32, i32
  }
  func.func @transform_4(%arg0: i32) -> (i32, i32) {
    %c0_i32 = arith.constant 0 : i32
    %c0_i32_0 = arith.constant 0 : i32
    return %arg0, %c0_i32 : i32, i32
  }
}

</mosaic_0001>

<llo_original>
// kernel: bilstm_forward.1
$region0: #{bilstm_forward.1}
  #allocation0 [shape = 'u32[]', space=smem, size = 0x4, offset = 0x4, fixed_abs, tag = 'smem constant byte address 0x4 - core index']
  #allocation1 [shape = 'u32[144,128]{1,0:T(1,128)}', space=vmem, size = 0x12000, scoped, tag = 'internal scratch']
  #allocation2 [shape = 'f32[16,8,512]{2,1,0:T(8,128)}', space=vmem, size = 0x40000, scoped, tag = 'scratch operand']
  #allocation3 [shape = 'f32[8,128]{1,0:T(8,128)}', space=vmem, size = 0x1000, scoped, tag = 'scratch operand']
  #allocation4 [shape = 'f32[8,128]{1,0:T(8,128)}', space=vmem, size = 0x1000, scoped, tag = 'scratch operand']
  #allocation5 [shape = 's32[2]{0}', space=sflag, size = 0x8, scoped, tag = 'scratch operand']
  #allocation6 [shape = 's32[]', space=sflag, size = 0x4, offset = 0, fixed_abs, tag = 'sflag constant byte address 0x0 - dummy sync flag']
  %s0 = inlined_call_operand.vmem [shape: f32[8,8,512], index: 0, kind: input, shape index: {}]
  %s1 = inlined_call_operand.vmem [shape: f32[128,512], index: 1, kind: input, shape index: {}]
  %s2 = inlined_call_operand.vmem [shape: f32[128,128], index: 2, kind: input, shape index: {}]
  %s3 = inlined_call_operand.vmem [shape: f32[1,128], index: 3, kind: input, shape index: {}]
  %s4 = inlined_call_operand.vmem [shape: f32[8,128], index: 4, kind: output, shape index: {}]
  %s5 = sld [smem:[#allocation0]]
  $region56: #{bilstm_forward.1} parent=0
    _
  %s7 = ssub.s32 1, %s5
  %s8 = scalar_select 0, %s7, %s5
  // Predicated region
  $region2: #{bilstm_forward.1} parent=0 // pred_check
    _
  $region3: #{bilstm_forward.1} parent=0 // pred_check_branch
    %10 = sbr.rel (0) target = $region5
  $region4: #{bilstm_forward.1} parent=0 // pred_region
    _
  $region5: #{bilstm_forward.1} parent=0 // pred_fallthru
    _
  // Predicated region
  $region6: #{bilstm_forward.1} parent=0 // pred_check
    _
  $region7: #{bilstm_forward.1} parent=0 // pred_check_branch
    %12 = sbr.rel (0) target = $region9
  $region8: #{bilstm_forward.1} parent=0 // pred_region
    _
  $region9: #{bilstm_forward.1} parent=0 // pred_fallthru
    _
  // Predicated region
  $region10: #{bilstm_forward.1} parent=0 // pred_check
    _
  $region11: #{bilstm_forward.1} parent=0 // pred_check_branch
    %14 = sbr.rel (0) target = $region13
  $region12: #{bilstm_forward.1} parent=0 // pred_region
    _
  $region13: #{bilstm_forward.1} parent=0 // pred_fallthru
    _
  %s15 = smul.u32 0, 8
  %v16 = vld [vmem:[%s1] sm:$0xff]
  %v17 = vld [vmem:[%s1 + $0x8] sm:$0xff]
  %v18 = vld [vmem:[%s1 + $0x10] sm:$0xff]
  %v19 = vld [vmem:[%s1 + $0x18] sm:$0xff]
  %v20 = vld [vmem:[%s1 + $0x20] sm:$0xff]
  %v21 = vld [vmem:[%s1 + $0x28] sm:$0xff]
  %v22 = vld [vmem:[%s1 + $0x30] sm:$0xff]
  %v23 = vld [vmem:[%s1 + $0x38] sm:$0xff]
  %v24 = vld [vmem:[%s1 + $0x40] sm:$0xff]
  %v25 = vld [vmem:[%s1 + $0x48] sm:$0xff]
  %v26 = vld [vmem:[%s1 + $0x50] sm:$0xff]
  %v27 = vld [vmem:[%s1 + $0x58] sm:$0xff]
  %v28 = vld [vmem:[%s1 + $0x60] sm:$0xff]
  %v29 = vld [vmem:[%s1 + $0x68] sm:$0xff]
  %v30 = vld [vmem:[%s1 + $0x70] sm:$0xff]
  %v31 = vld [vmem:[%s1 + $0x78] sm:$0xff]
  %v32 = vld [vmem:[%s1 + $0x80] sm:$0xff]
  %v33 = vld [vmem:[%s1 + $0x88] sm:$0xff]
  %v34 = vld [vmem:[%s1 + $0x90] sm:$0xff]
  %v35 = vld [vmem:[%s1 + $0x98] sm:$0xff]
  %v36 = vld [vmem:[%s1 + $0xa0] sm:$0xff]
  %v37 = vld [vmem:[%s1 + $0xa8] sm:$0xff]
  %v38 = vld [vmem:[%s1 + $0xb0] sm:$0xff]
  %v39 = vld [vmem:[%s1 + $0xb8] sm:$0xff]
  %v40 = vld [vmem:[%s1 + $0xc0] sm:$0xff]
  %v41 = vld [vmem:[%s1 + $0xc8] sm:$0xff]
  %v42 = vld [vmem:[%s1 + $0xd0] sm:$0xff]
  %v43 = vld [vmem:[%s1 + $0xd8] sm:$0xff]
  %v44 = vld [vmem:[%s1 + $0xe0] sm:$0xff]
  %v45 = vld [vmem:[%s1 + $0xe8] sm:$0xff]
  %v46 = vld [vmem:[%s1 + $0xf0] sm:$0xff]
  %v47 = vld [vmem:[%s1 + $0xf8] sm:$0xff]
  %v48 = vld [vmem:[%s1 + $0x100] sm:$0xff]
  %v49 = vld [vmem:[%s1 + $0x108] sm:$0xff]
  %v50 = vld [vmem:[%s1 + $0x110] sm:$0xff]
  %v51 = vld [vmem:[%s1 + $0x118] sm:$0xff]
  %v52 = vld [vmem:[%s1 + $0x120] sm:$0xff]
  %v53 = vld [vmem:[%s1 + $0x128] sm:$0xff]
  %v54 = vld [vmem:[%s1 + $0x130] sm:$0xff]
  %v55 = vld [vmem:[%s1 + $0x138] sm:$0xff]
  %v56 = vld [vmem:[%s1 + $0x140] sm:$0xff]
  %v57 = vld [vmem:[%s1 + $0x148] sm:$0xff]
  %v58 = vld [vmem:[%s1 + $0x150] sm:$0xff]
  %v59 = vld [vmem:[%s1 + $0x158] sm:$0xff]
  %v60 = vld [vmem:[%s1 + $0x160] sm:$0xff]
  %v61 = vld [vmem:[%s1 + $0x168] sm:$0xff]
  %v62 = vld [vmem:[%s1 + $0x170] sm:$0xff]
  %v63 = vld [vmem:[%s1 + $0x178] sm:$0xff]
  %v64 = vld [vmem:[%s1 + $0x180] sm:$0xff]
  %v65 = vld [vmem:[%s1 + $0x188] sm:$0xff]
  %v66 = vld [vmem:[%s1 + $0x190] sm:$0xff]
  %v67 = vld [vmem:[%s1 + $0x198] sm:$0xff]
  %v68 = vld [vmem:[%s1 + $0x1a0] sm:$0xff]
  %v69 = vld [vmem:[%s1 + $0x1a8] sm:$0xff]
  %v70 = vld [vmem:[%s1 + $0x1b0] sm:$0xff]
  %v71 = vld [vmem:[%s1 + $0x1b8] sm:$0xff]
  %v72 = vld [vmem:[%s1 + $0x1c0] sm:$0xff]
  %v73 = vld [vmem:[%s1 + $0x1c8] sm:$0xff]
  %v74 = vld [vmem:[%s1 + $0x1d0] sm:$0xff]
  %v75 = vld [vmem:[%s1 + $0x1d8] sm:$0xff]
  %v76 = vld [vmem:[%s1 + $0x1e0] sm:$0xff]
  %v77 = vld [vmem:[%s1 + $0x1e8] sm:$0xff]
  %v78 = vld [vmem:[%s1 + $0x1f0] sm:$0xff]
  %v79 = vld [vmem:[%s1 + $0x1f8] sm:$0xff]
  %s80 = sshra.s32 %s15, 3
  %s81 = sand.u32 %s15, 7
  %s82 = smul.u32 %s80, 4
  %s83 = smul.addr %s82, 8
  %s84 = scalar_lea.vmem %s0, %s83
  %p86 = scmp.lt.u32.totalorder 256, 8
  %p87 = pneg %p86
  // Predicated region
  $region14: #{bilstm_forward.1} parent=0 // pred_check
    _
  $region15: #{bilstm_forward.1} parent=0 // pred_check_branch
    %89 = sbr.rel (%p86) target = $region17
  $region16: #{bilstm_forward.1} parent=0 // pred_region
    %s105 = sand.u32 256, 7
    %p106 = scmp.eq.s32.totalorder %s105, 0
    // Predicated region
    $region29: #{bilstm_forward.1} parent=16 // pred_check
      %p107 = pneg %p106
    $region30: #{bilstm_forward.1} parent=16 // pred_check_branch
      %109 = sbr.rel (%p107) target = $region32
    $region31: #{bilstm_forward.1} parent=16 // pred_region
      loop: start=0, step=1, limit=1
      $region33: #{bilstm_forward.1} parent=31 // loop_pre_header
        _
      $region34: #{bilstm_forward.1} parent=31 // loop_header
        %s111 = sphi 0, %s115
        %p112 = scmp.ge.s32.totalorder %s111, 1
        %s116 = sphi %s84, %s84
        %s117 = sphi [#allocation2], [#allocation2]
      $region35: #{bilstm_forward.1} parent=31 // loop_header_branch
        %114 = sbr.rel (%p112) target = $region39
      $region36: #{bilstm_forward.1} parent=31 // loop_body
        %v118 = vld [vmem:[%s116] sm:$0xff]
        %119 = vst [vmem:[%s117] sm:$0xff] %v118
        %v120 = vld [vmem:[%s116 + $0x8] sm:$0xff]
        %121 = vst [vmem:[%s117 + $0x8] sm:$0xff] %v120
        %v122 = vld [vmem:[%s116 + $0x10] sm:$0xff]
        %123 = vst [vmem:[%s117 + $0x10] sm:$0xff] %v122
        %v124 = vld [vmem:[%s116 + $0x18] sm:$0xff]
        %125 = vst [vmem:[%s117 + $0x18] sm:$0xff] %v124
        %v126 = vld [vmem:[%s116 + $0x20] sm:$0xff]
        %127 = vst [vmem:[%s117 + $0x20] sm:$0xff] %v126
        %v128 = vld [vmem:[%s116 + $0x28] sm:$0xff]
        %129 = vst [vmem:[%s117 + $0x28] sm:$0xff] %v128
        %v130 = vld [vmem:[%s116 + $0x30] sm:$0xff]
        %131 = vst [vmem:[%s117 + $0x30] sm:$0xff] %v130
        %v132 = vld [vmem:[%s116 + $0x38] sm:$0xff]
        %133 = vst [vmem:[%s117 + $0x38] sm:$0xff] %v132
        %v134 = vld [vmem:[%s116 + $0x40] sm:$0xff]
        %135 = vst [vmem:[%s117 + $0x40] sm:$0xff] %v134
        %v136 = vld [vmem:[%s116 + $0x48] sm:$0xff]
        %137 = vst [vmem:[%s117 + $0x48] sm:$0xff] %v136
        %v138 = vld [vmem:[%s116 + $0x50] sm:$0xff]
        %139 = vst [vmem:[%s117 + $0x50] sm:$0xff] %v138
        %v140 = vld [vmem:[%s116 + $0x58] sm:$0xff]
        %141 = vst [vmem:[%s117 + $0x58] sm:$0xff] %v140
        %v142 = vld [vmem:[%s116 + $0x60] sm:$0xff]
        %143 = vst [vmem:[%s117 + $0x60] sm:$0xff] %v142
        %v144 = vld [vmem:[%s116 + $0x68] sm:$0xff]
        %145 = vst [vmem:[%s117 + $0x68] sm:$0xff] %v144
        %v146 = vld [vmem:[%s116 + $0x70] sm:$0xff]
        %147 = vst [vmem:[%s117 + $0x70] sm:$0xff] %v146
        %v148 = vld [vmem:[%s116 + $0x78] sm:$0xff]
        %149 = vst [vmem:[%s117 + $0x78] sm:$0xff] %v148
        %v150 = vld [vmem:[%s116 + $0x80] sm:$0xff]
        %151 = vst [vmem:[%s117 + $0x80] sm:$0xff] %v150
        %v152 = vld [vmem:[%s116 + $0x88] sm:$0xff]
        %153 = vst [vmem:[%s117 + $0x88] sm:$0xff] %v152
        %v154 = vld [vmem:[%s116 + $0x90] sm:$0xff]
        %155 = vst [vmem:[%s117 + $0x90] sm:$0xff] %v154
        %v156 = vld [vmem:[%s116 + $0x98] sm:$0xff]
        %157 = vst [vmem:[%s117 + $0x98] sm:$0xff] %v156
        %v158 = vld [vmem:[%s116 + $0xa0] sm:$0xff]
        %159 = vst [vmem:[%s117 + $0xa0] sm:$0xff] %v158
        %v160 = vld [vmem:[%s116 + $0xa8] sm:$0xff]
        %161 = vst [vmem:[%s117 + $0xa8] sm:$0xff] %v160
        %v162 = vld [vmem:[%s116 + $0xb0] sm:$0xff]
        %163 = vst [vmem:[%s117 + $0xb0] sm:$0xff] %v162
        %v164 = vld [vmem:[%s116 + $0xb8] sm:$0xff]
        %165 = vst [vmem:[%s117 + $0xb8] sm:$0xff] %v164
        %v166 = vld [vmem:[%s116 + $0xc0] sm:$0xff]
        %167 = vst [vmem:[%s117 + $0xc0] sm:$0xff] %v166
        %v168 = vld [vmem:[%s116 + $0xc8] sm:$0xff]
        %169 = vst [vmem:[%s117 + $0xc8] sm:$0xff] %v168
        %v170 = vld [vmem:[%s116 + $0xd0] sm:$0xff]
        %171 = vst [vmem:[%s117 + $0xd0] sm:$0xff] %v170
        %v172 = vld [vmem:[%s116 + $0xd8] sm:$0xff]
        %173 = vst [vmem:[%s117 + $0xd8] sm:$0xff] %v172
        %v174 = vld [vmem:[%s116 + $0xe0] sm:$0xff]
        %175 = vst [vmem:[%s117 + $0xe0] sm:$0xff] %v174
        %v176 = vld [vmem:[%s116 + $0xe8] sm:$0xff]
        %177 = vst [vmem:[%s117 + $0xe8] sm:$0xff] %v176
        %v178 = vld [vmem:[%s116 + $0xf0] sm:$0xff]
        %179 = vst [vmem:[%s117 + $0xf0] sm:$0xff] %v178
        %v180 = vld [vmem:[%s116 + $0xf8] sm:$0xff]
        %181 = vst [vmem:[%s117 + $0xf8] sm:$0xff] %v180
      $region37: #{bilstm_forward.1} parent=31 // loop_footer
        %s115 = sadd.s32 1, %s111
      $region38: #{bilstm_forward.1} parent=31 // loop_footer_branch
        %110 = sbr.rel target = $region34
      $region39: #{bilstm_forward.1} parent=31 // loop_exit
        _
    $region32: #{bilstm_forward.1} parent=16 // pred_fallthru
      _
    %p182 = pneg %p106
    // Predicated region
    $region40: #{bilstm_forward.1} parent=16 // pred_check
      _
    $region41: #{bilstm_forward.1} parent=16 // pred_check_branch
      %184 = sbr.rel (%p106) target = $region43
    $region42: #{bilstm_forward.1} parent=16 // pred_region
      %s185 = sand.u32 256, 7
    $region43: #{bilstm_forward.1} parent=16 // pred_fallthru
      _
  $region17: #{bilstm_forward.1} parent=0 // pred_fallthru
    _
  // Predicated region
  $region18: #{bilstm_forward.1} parent=0 // pred_check
    %p90 = pneg %p86
  $region19: #{bilstm_forward.1} parent=0 // pred_check_branch
    %92 = sbr.rel (%p90) target = $region21
  $region20: #{bilstm_forward.1} parent=0 // pred_region
    %s93 = sshll.u32 1, 256
    %s94 = ssub.s32 %s93, 1
    loop: start=0, step=1, limit=1
    $region22: #{bilstm_forward.1} parent=20 // loop_pre_header
      _
    $region23: #{bilstm_forward.1} parent=20 // loop_header
      %s96 = sphi 0, %s100
      %p97 = scmp.ge.s32.totalorder %s96, 1
      %s101 = sphi %s84, %s84
      %s102 = sphi [#allocation2], [#allocation2]
    $region24: #{bilstm_forward.1} parent=20 // loop_header_branch
      %99 = sbr.rel (%p97) target = $region28
    $region25: #{bilstm_forward.1} parent=20 // loop_body
      %v103 = vld [vmem:[%s101] sm:%s94]
      %104 = vst [vmem:[%s102] sm:%s94] %v103
    $region26: #{bilstm_forward.1} parent=20 // loop_footer
      %s100 = sadd.s32 1, %s96
    $region27: #{bilstm_forward.1} parent=20 // loop_footer_branch
      %95 = sbr.rel target = $region23
    $region28: #{bilstm_forward.1} parent=20 // loop_exit
      _
  $region21: #{bilstm_forward.1} parent=0 // pred_fallthru
    _
  // Predicated region
  $region44: #{bilstm_forward.1} parent=0 // pred_check
    _
  $region45: #{bilstm_forward.1} parent=0 // pred_check_branch
    %188 = sbr.rel (0) target = $region47
  $region46: #{bilstm_forward.1} parent=0 // pred_region
    %189 = vsyncadd [#allocation5], 4096
  $region47: #{bilstm_forward.1} parent=0 // pred_fallthru
    _
  %190 = vst [vmem:[#allocation3] sm:$0xff] 0.0
  %191 = vst [vmem:[#allocation4] sm:$0xff] 0.0
  %s192 = smul.u32 8, 8
  %s193 = smul.u32 %s192, 1
  %s194 = smul.u32 %s193, 4
  %s195 = sshll.u32 %s194, 4
  %196 = dma.done [#allocation5], %s195
  %v197 = vld [vmem:[#allocation3] sm:$0xff]
  %v198 = vld [vmem:[#allocation4] sm:$0xff]
  %v199 = vld [vmem:[#allocation2] sm:$0xff]
  %v200 = vld [vmem:[#allocation2 + $0x8] sm:$0xff]
  %v201 = vld [vmem:[#allocation2 + $0x10] sm:$0xff]
  %v202 = vld [vmem:[#allocation2 + $0x18] sm:$0xff]
  %203 = vmatprep.subr.mxu0 %v77
  %204 = vmatpush1.msra.mxu0 %v76
  %205 = vmatprep.subr.mxu0 %v73
  %206 = vmatpush1.msra.mxu0 %v72
  %207 = vmatprep.subr.mxu0 %v69
  %208 = vmatpush1.msra.mxu0 %v68
  %209 = vmatprep.subr.mxu0 %v65
  %210 = vmatpush1.msra.mxu0 %v64
  %211 = vmatprep.subr.mxu0 %v61
  %212 = vmatpush1.msra.mxu0 %v60
  %213 = vmatprep.subr.mxu0 %v57
  %214 = vmatpush1.msra.mxu0 %v56
  %215 = vmatprep.subr.mxu0 %v53
  %216 = vmatpush1.msra.mxu0 %v52
  %217 = vmatprep.subr.mxu0 %v49
  %218 = vmatpush1.msra.mxu0 %v48
  %219 = vmatprep.subr.mxu0 %v45
  %220 = vmatpush1.msra.mxu0 %v44
  %221 = vmatprep.subr.mxu0 %v41
  %222 = vmatpush1.msra.mxu0 %v40
  %223 = vmatprep.subr.mxu0 %v37
  %224 = vmatpush1.msra.mxu0 %v36
  %225 = vmatprep.subr.mxu0 %v33
  %226 = vmatpush1.msra.mxu0 %v32
  %227 = vmatprep.subr.mxu0 %v29
  %228 = vmatpush1.msra.mxu0 %v28
  %229 = vmatprep.subr.mxu0 %v25
  %230 = vmatpush1.msra.mxu0 %v24
  %231 = vmatprep.subr.mxu0 %v21
  %232 = vmatpush1.msra.mxu0 %v20
  %233 = vmatprep.subr.mxu0 %v17
  %234 = vmatpush1.msra.mxu0 %v16
  %235 = vmatprep.subr.mxu0 0.0
  %236 = vmatpush2.msra.mxu0 0.0
  %237 = vmatprep.subr.mxu0 0.0
  %238 = vmatpush2.msra.mxu0 0.0
  %239 = vmatprep.subr.mxu0 0.0
  %240 = vmatpush2.msra.mxu0 0.0
  %241 = vmatprep.subr.mxu0 0.0
  %242 = vmatpush2.msra.mxu0 0.0
  %243 = vmatprep.subr.mxu0 0.0
  %244 = vmatpush2.msra.mxu0 0.0
  %245 = vmatprep.subr.mxu0 0.0
  %246 = vmatpush2.msra.mxu0 0.0
  %247 = vmatprep.subr.mxu0 0.0
  %248 = vmatpush2.msra.mxu0 0.0
  %249 = vmatprep.subr.mxu0 0.0
  %250 = vmatpush2.msra.mxu0 0.0
  %251 = vmatprep.subr.mxu0 0.0
  %252 = vmatpush2.msra.mxu0 0.0
  %253 = vmatprep.subr.mxu0 0.0
  %254 = vmatpush2.msra.mxu0 0.0
  %255 = vmatprep.subr.mxu0 0.0
  %256 = vmatpush2.msra.mxu0 0.0
  %257 = vmatprep.subr.mxu0 0.0
  %258 = vmatpush2.msra.mxu0 0.0
  %259 = vmatprep.subr.mxu0 0.0
  %260 = vmatpush2.msra.mxu0 0.0
  %261 = vmatprep.subr.mxu0 0.0
  %262 = vmatpush2.msra.mxu0 0.0
  %263 = vmatprep.subr.mxu0 0.0
  %264 = vmatpush2.msra.mxu0 0.0
  %265 = vmatprep.subr.mxu0 0.0
  %266 = vmatpush2.msra.mxu0 0.0
  %267 = vmatprep.mubr.f32.mxu0 0.0
  %268 = vmatmul.mubr.f32.gmra.mxu0 %v197
  %v269 = vpop.f32.mrf.mxu0
  %v270 = vadd.f32 0.0, %v269
  %v271 = vpop.f32.mrf.mxu0
  %v272 = vadd.f32 0.0, %v271
  %273 = vdwg.mxu0
  %274 = vmatprep.subr.mxu0 %v79
  %275 = vmatpush1.msra.mxu0 %v78
  %276 = vmatprep.subr.mxu0 %v75
  %277 = vmatpush1.msra.mxu0 %v74
  %278 = vmatprep.subr.mxu0 %v71
  %279 = vmatpush1.msra.mxu0 %v70
  %280 = vmatprep.subr.mxu0 %v67
  %281 = vmatpush1.msra.mxu0 %v66
  %282 = vmatprep.subr.mxu0 %v63
  %283 = vmatpush1.msra.mxu0 %v62
  %284 = vmatprep.subr.mxu0 %v59
  %285 = vmatpush1.msra.mxu0 %v58
  %286 = vmatprep.subr.mxu0 %v55
  %287 = vmatpush1.msra.mxu0 %v54
  %288 = vmatprep.subr.mxu0 %v51
  %289 = vmatpush1.msra.mxu0 %v50
  %290 = vmatprep.subr.mxu0 %v47
  %291 = vmatpush1.msra.mxu0 %v46
  %292 = vmatprep.subr.mxu0 %v43
  %293 = vmatpush1.msra.mxu0 %v42
  %294 = vmatprep.subr.mxu0 %v39
  %295 = vmatpush1.msra.mxu0 %v38
  %296 = vmatprep.subr.mxu0 %v35
  %297 = vmatpush1.msra.mxu0 %v34
  %298 = vmatprep.subr.mxu0 %v31
  %299 = vmatpush1.msra.mxu0 %v30
  %300 = vmatprep.subr.mxu0 %v27
  %301 = vmatpush1.msra.mxu0 %v26
  %302 = vmatprep.subr.mxu0 %v23
  %303 = vmatpush1.msra.mxu0 %v22
  %304 = vmatprep.subr.mxu0 %v19
  %305 = vmatpush1.msra.mxu0 %v18
  %306 = vmatprep.subr.mxu0 0.0
  %307 = vmatpush2.msra.mxu0 0.0
  %308 = vmatprep.subr.mxu0 0.0
  %309 = vmatpush2.msra.mxu0 0.0
  %310 = vmatprep.subr.mxu0 0.0
  %311 = vmatpush2.msra.mxu0 0.0
  %312 = vmatprep.subr.mxu0 0.0
  %313 = vmatpush2.msra.mxu0 0.0
  %314 = vmatprep.subr.mxu0 0.0
  %315 = vmatpush2.msra.mxu0 0.0
  %316 = vmatprep.subr.mxu0 0.0
  %317 = vmatpush2.msra.mxu0 0.0
  %318 = vmatprep.subr.mxu0 0.0
  %319 = vmatpush2.msra.mxu0 0.0
  %320 = vmatprep.subr.mxu0 0.0
  %321 = vmatpush2.msra.mxu0 0.0
  %322 = vmatprep.subr.mxu0 0.0
  %323 = vmatpush2.msra.mxu0 0.0
  %324 = vmatprep.subr.mxu0 0.0
  %325 = vmatpush2.msra.mxu0 0.0
  %326 = vmatprep.subr.mxu0 0.0
  %327 = vmatpush2.msra.mxu0 0.0
  %328 = vmatprep.subr.mxu0 0.0
  %329 = vmatpush2.msra.mxu0 0.0
  %330 = vmatprep.subr.mxu0 0.0
  %331 = vmatpush2.msra.mxu0 0.0
  %332 = vmatprep.subr.mxu0 0.0
  %333 = vmatpush2.msra.mxu0 0.0
  %334 = vmatprep.subr.mxu0 0.0
  %335 = vmatpush2.msra.mxu0 0.0
  %336 = vmatprep.subr.mxu0 0.0
  %337 = vmatpush2.msra.mxu0 0.0
  %338 = vmatprep.mubr.f32.mxu0 0.0
  %339 = vmatmul.mubr.f32.gmra.mxu0 %v197
  %v340 = vpop.f32.mrf.mxu0
  %v341 = vadd.f32 0.0, %v340
  %v342 = vpop.f32.mrf.mxu0
  %v343 = vadd.f32 0.0, %v342
  %344 = vdwg.mxu0
  %v345 = vadd.f32 %v199, %v270
  %v346 = vadd.f32 %v200, %v272
  %v347 = vadd.f32 %v201, %v341
  %v348 = vadd.f32 %v202, %v343
  %v349 = vmul.f32 %v345, 0.5
  %v350 = vtanh.pop %v349
  %v351 = vmul.f32 %v350, 0.5
  %v352 = vadd.f32 %v351, 0.5
  %v353 = vmul.f32 %v346, 0.5
  %v354 = vtanh.pop %v353
  %v355 = vmul.f32 %v354, 0.5
  %v356 = vadd.f32 %v355, 0.5
  %v357 = vtanh.pop %v347
  %v358 = vmul.f32 %v348, 0.5
  %v359 = vtanh.pop %v358
  %v360 = vmul.f32 %v359, 0.5
  %v361 = vadd.f32 %v360, 0.5
  %v362 = vmul.f32 %v356, %v198
  %v363 = vmul.f32 %v352, %v357
  %v364 = vadd.f32 %v362, %v363
  %v365 = vtanh.pop %v364
  %v366 = vmul.f32 %v361, %v365
  %s367 = scalar_lea.vmem [#allocation2], 32
  %v368 = vld [vmem:[%s367] sm:$0xff]
  %v369 = vld [vmem:[%s367 + $0x8] sm:$0xff]
  %v370 = vld [vmem:[%s367 + $0x10] sm:$0xff]
  %v371 = vld [vmem:[%s367 + $0x18] sm:$0xff]
  %372 = vmatprep.subr.mxu0 %v77
  %373 = vmatpush1.msra.mxu0 %v76
  %374 = vmatprep.subr.mxu0 %v73
  %375 = vmatpush1.msra.mxu0 %v72
  %376 = vmatprep.subr.mxu0 %v69
  %377 = vmatpush1.msra.mxu0 %v68
  %378 = vmatprep.subr.mxu0 %v65
  %379 = vmatpush1.msra.mxu0 %v64
  %380 = vmatprep.subr.mxu0 %v61
  %381 = vmatpush1.msra.mxu0 %v60
  %382 = vmatprep.subr.mxu0 %v57
  %383 = vmatpush1.msra.mxu0 %v56
  %384 = vmatprep.subr.mxu0 %v53
  %385 = vmatpush1.msra.mxu0 %v52
  %386 = vmatprep.subr.mxu0 %v49
  %387 = vmatpush1.msra.mxu0 %v48
  %388 = vmatprep.subr.mxu0 %v45
  %389 = vmatpush1.msra.mxu0 %v44
  %390 = vmatprep.subr.mxu0 %v41
  %391 = vmatpush1.msra.mxu0 %v40
  %392 = vmatprep.subr.mxu0 %v37
  %393 = vmatpush1.msra.mxu0 %v36
  %394 = vmatprep.subr.mxu0 %v33
  %395 = vmatpush1.msra.mxu0 %v32
  %396 = vmatprep.subr.mxu0 %v29
  %397 = vmatpush1.msra.mxu0 %v28
  %398 = vmatprep.subr.mxu0 %v25
  %399 = vmatpush1.msra.mxu0 %v24
  %400 = vmatprep.subr.mxu0 %v21
  %401 = vmatpush1.msra.mxu0 %v20
  %402 = vmatprep.subr.mxu0 %v17
  %403 = vmatpush1.msra.mxu0 %v16
  %404 = vmatprep.subr.mxu0 0.0
  %405 = vmatpush2.msra.mxu0 0.0
  %406 = vmatprep.subr.mxu0 0.0
  %407 = vmatpush2.msra.mxu0 0.0
  %408 = vmatprep.subr.mxu0 0.0
  %409 = vmatpush2.msra.mxu0 0.0
  %410 = vmatprep.subr.mxu0 0.0
  %411 = vmatpush2.msra.mxu0 0.0
  %412 = vmatprep.subr.mxu0 0.0
  %413 = vmatpush2.msra.mxu0 0.0
  %414 = vmatprep.subr.mxu0 0.0
  %415 = vmatpush2.msra.mxu0 0.0
  %416 = vmatprep.subr.mxu0 0.0
  %417 = vmatpush2.msra.mxu0 0.0
  %418 = vmatprep.subr.mxu0 0.0
  %419 = vmatpush2.msra.mxu0 0.0
  %420 = vmatprep.subr.mxu0 0.0
  %421 = vmatpush2.msra.mxu0 0.0
  %422 = vmatprep.subr.mxu0 0.0
  %423 = vmatpush2.msra.mxu0 0.0
  %424 = vmatprep.subr.mxu0 0.0
  %425 = vmatpush2.msra.mxu0 0.0
  %426 = vmatprep.subr.mxu0 0.0
  %427 = vmatpush2.msra.mxu0 0.0
  %428 = vmatprep.subr.mxu0 0.0
  %429 = vmatpush2.msra.mxu0 0.0
  %430 = vmatprep.subr.mxu0 0.0
  %431 = vmatpush2.msra.mxu0 0.0
  %432 = vmatprep.subr.mxu0 0.0
  %433 = vmatpush2.msra.mxu0 0.0
  %434 = vmatprep.subr.mxu0 0.0
  %435 = vmatpush2.msra.mxu0 0.0
  %436 = vmatprep.mubr.f32.mxu0 0.0
  %437 = vmatmul.mubr.f32.gmra.mxu0 %v366
  %v438 = vpop.f32.mrf.mxu0
  %v439 = vadd.f32 0.0, %v438
  %v440 = vpop.f32.mrf.mxu0
  %v441 = vadd.f32 0.0, %v440
  %442 = vdwg.mxu0
  %443 = vmatprep.subr.mxu0 %v79
  %444 = vmatpush1.msra.mxu0 %v78
  %445 = vmatprep.subr.mxu0 %v75
  %446 = vmatpush1.msra.mxu0 %v74
  %447 = vmatprep.subr.mxu0 %v71
  %448 = vmatpush1.msra.mxu0 %v70
  %449 = vmatprep.subr.mxu0 %v67
  %450 = vmatpush1.msra.mxu0 %v66
  %451 = vmatprep.subr.mxu0 %v63
  %452 = vmatpush1.msra.mxu0 %v62
  %453 = vmatprep.subr.mxu0 %v59
  %454 = vmatpush1.msra.mxu0 %v58
  %455 = vmatprep.subr.mxu0 %v55
  %456 = vmatpush1.msra.mxu0 %v54
  %457 = vmatprep.subr.mxu0 %v51
  %458 = vmatpush1.msra.mxu0 %v50
  %459 = vmatprep.subr.mxu0 %v47
  %460 = vmatpush1.msra.mxu0 %v46
  %461 = vmatprep.subr.mxu0 %v43
  %462 = vmatpush1.msra.mxu0 %v42
  %463 = vmatprep.subr.mxu0 %v39
  %464 = vmatpush1.msra.mxu0 %v38
  %465 = vmatprep.subr.mxu0 %v35
  %466 = vmatpush1.msra.mxu0 %v34
  %467 = vmatprep.subr.mxu0 %v31
  %468 = vmatpush1.msra.mxu0 %v30
  %469 = vmatprep.subr.mxu0 %v27
  %470 = vmatpush1.msra.mxu0 %v26
  %471 = vmatprep.subr.mxu0 %v23
  %472 = vmatpush1.msra.mxu0 %v22
  %473 = vmatprep.subr.mxu0 %v19
  %474 = vmatpush1.msra.mxu0 %v18
  %475 = vmatprep.subr.mxu0 0.0
  %476 = vmatpush2.msra.mxu0 0.0
  %477 = vmatprep.subr.mxu0 0.0
  %478 = vmatpush2.msra.mxu0 0.0
  %479 = vmatprep.subr.mxu0 0.0
  %480 = vmatpush2.msra.mxu0 0.0
  %481 = vmatprep.subr.mxu0 0.0
  %482 = vmatpush2.msra.mxu0 0.0
  %483 = vmatprep.subr.mxu0 0.0
  %484 = vmatpush2.msra.mxu0 0.0
  %485 = vmatprep.subr.mxu0 0.0
  %486 = vmatpush2.msra.mxu0 0.0
  %487 = vmatprep.subr.mxu0 0.0
  %488 = vmatpush2.msra.mxu0 0.0
  %489 = vmatprep.subr.mxu0 0.0
  %490 = vmatpush2.msra.mxu0 0.0
  %491 = vmatprep.subr.mxu0 0.0
  %492 = vmatpush2.msra.mxu0 0.0
  %493 = vmatprep.subr.mxu0 0.0
  %494 = vmatpush2.msra.mxu0 0.0
  %495 = vmatprep.subr.mxu0 0.0
  %496 = vmatpush2.msra.mxu0 0.0
  %497 = vmatprep.subr.mxu0 0.0
  %498 = vmatpush2.msra.mxu0 0.0
  %499 = vmatprep.subr.mxu0 0.0
  %500 = vmatpush2.msra.mxu0 0.0
  %501 = vmatprep.subr.mxu0 0.0
  %502 = vmatpush2.msra.mxu0 0.0
  %503 = vmatprep.subr.mxu0 0.0
  %504 = vmatpush2.msra.mxu0 0.0
  %505 = vmatprep.subr.mxu0 0.0
  %506 = vmatpush2.msra.mxu0 0.0
  %507 = vmatprep.mubr.f32.mxu0 0.0
  %508 = vmatmul.mubr.f32.gmra.mxu0 %v366
  %v509 = vpop.f32.mrf.mxu0
  %v510 = vadd.f32 0.0, %v509
  %v511 = vpop.f32.mrf.mxu0
  %v512 = vadd.f32 0.0, %v511
  %513 = vdwg.mxu0
  %v514 = vadd.f32 %v368, %v439
  %v515 = vadd.f32 %v369, %v441
  %v516 = vadd.f32 %v370, %v510
  %v517 = vadd.f32 %v371, %v512
  %v518 = vmul.f32 %v514, 0.5
  %v519 = vtanh.pop %v518
  %v520 = vmul.f32 %v519, 0.5
  %v521 = vadd.f32 %v520, 0.5
  %v522 = vmul.f32 %v515, 0.5
  %v523 = vtanh.pop %v522
  %v524 = vmul.f32 %v523, 0.5
  %v525 = vadd.f32 %v524, 0.5
  %v526 = vtanh.pop %v516
  %v527 = vmul.f32 %v517, 0.5
  %v528 = vtanh.pop %v527
  %v529 = vmul.f32 %v528, 0.5
  %v530 = vadd.f32 %v529, 0.5
  %v531 = vmul.f32 %v525, %v364
  %v532 = vmul.f32 %v521, %v526
  %v533 = vadd.f32 %v531, %v532
  %v534 = vtanh.pop %v533
  %v535 = vmul.f32 %v530, %v534
  %s536 = scalar_lea.vmem [#allocation2], 64
  %v537 = vld [vmem:[%s536] sm:$0xff]
  %v538 = vld [vmem:[%s536 + $0x8] sm:$0xff]
  %v539 = vld [vmem:[%s536 + $0x10] sm:$0xff]
  %v540 = vld [vmem:[%s536 + $0x18] sm:$0xff]
  %541 = vmatprep.subr.mxu0 %v77
  %542 = vmatpush1.msra.mxu0 %v76
  %543 = vmatprep.subr.mxu0 %v73
  %544 = vmatpush1.msra.mxu0 %v72
  %545 = vmatprep.subr.mxu0 %v69
  %546 = vmatpush1.msra.mxu0 %v68
  %547 = vmatprep.subr.mxu0 %v65
  %548 = vmatpush1.msra.mxu0 %v64
  %549 = vmatprep.subr.mxu0 %v61
  %550 = vmatpush1.msra.mxu0 %v60
  %551 = vmatprep.subr.mxu0 %v57
  %552 = vmatpush1.msra.mxu0 %v56
  %553 = vmatprep.subr.mxu0 %v53
  %554 = vmatpush1.msra.mxu0 %v52
  %555 = vmatprep.subr.mxu0 %v49
  %556 = vmatpush1.msra.mxu0 %v48
  %557 = vmatprep.subr.mxu0 %v45
  %558 = vmatpush1.msra.mxu0 %v44
  %559 = vmatprep.subr.mxu0 %v41
  %560 = vmatpush1.msra.mxu0 %v40
  %561 = vmatprep.subr.mxu0 %v37
  %562 = vmatpush1.msra.mxu0 %v36
  %563 = vmatprep.subr.mxu0 %v33
  %564 = vmatpush1.msra.mxu0 %v32
  %565 = vmatprep.subr.mxu0 %v29
  %566 = vmatpush1.msra.mxu0 %v28
  %567 = vmatprep.subr.mxu0 %v25
  %568 = vmatpush1.msra.mxu0 %v24
  %569 = vmatprep.subr.mxu0 %v21
  %570 = vmatpush1.msra.mxu0 %v20
  %571 = vmatprep.subr.mxu0 %v17
  %572 = vmatpush1.msra.mxu0 %v16
  %573 = vmatprep.subr.mxu0 0.0
  %574 = vmatpush2.msra.mxu0 0.0
  %575 = vmatprep.subr.mxu0 0.0
  %576 = vmatpush2.msra.mxu0 0.0
  %577 = vmatprep.subr.mxu0 0.0
  %578 = vmatpush2.msra.mxu0 0.0
  %579 = vmatprep.subr.mxu0 0.0
  %580 = vmatpush2.msra.mxu0 0.0
  %581 = vmatprep.subr.mxu0 0.0
  %582 = vmatpush2.msra.mxu0 0.0
  %583 = vmatprep.subr.mxu0 0.0
  %584 = vmatpush2.msra.mxu0 0.0
  %585 = vmatprep.subr.mxu0 0.0
  %586 = vmatpush2.msra.mxu0 0.0
  %587 = vmatprep.subr.mxu0 0.0
  %588 = vmatpush2.msra.mxu0 0.0
  %589 = vmatprep.subr.mxu0 0.0
  %590 = vmatpush2.msra.mxu0 0.0
  %591 = vmatprep.subr.mxu0 0.0
  %592 = vmatpush2.msra.mxu0 0.0
  %593 = vmatprep.subr.mxu0 0.0
  %594 = vmatpush2.msra.mxu0 0.0
  %595 = vmatprep.subr.mxu0 0.0
  %596 = vmatpush2.msra.mxu0 0.0
  %597 = vmatprep.subr.mxu0 0.0
  %598 = vmatpush2.msra.mxu0 0.0
  %599 = vmatprep.subr.mxu0 0.0
  %600 = vmatpush2.msra.mxu0 0.0
  %601 = vmatprep.subr.mxu0 0.0
  %602 = vmatpush2.msra.mxu0 0.0
  %603 = vmatprep.subr.mxu0 0.0
  %604 = vmatpush2.msra.mxu0 0.0
  %605 = vmatprep.mubr.f32.mxu0 0.0
  %606 = vmatmul.mubr.f32.gmra.mxu0 %v535
  %v607 = vpop.f32.mrf.mxu0
  %v608 = vadd.f32 0.0, %v607
  %v609 = vpop.f32.mrf.mxu0
  %v610 = vadd.f32 0.0, %v609
  %611 = vdwg.mxu0
  %612 = vmatprep.subr.mxu0 %v79
  %613 = vmatpush1.msra.mxu0 %v78
  %614 = vmatprep.subr.mxu0 %v75
  %615 = vmatpush1.msra.mxu0 %v74
  %616 = vmatprep.subr.mxu0 %v71
  %617 = vmatpush1.msra.mxu0 %v70
  %618 = vmatprep.subr.mxu0 %v67
  %619 = vmatpush1.msra.mxu0 %v66
  %620 = vmatprep.subr.mxu0 %v63
  %621 = vmatpush1.msra.mxu0 %v62
  %622 = vmatprep.subr.mxu0 %v59
  %623 = vmatpush1.msra.mxu0 %v58
  %624 = vmatprep.subr.mxu0 %v55
  %625 = vmatpush1.msra.mxu0 %v54
  %626 = vmatprep.subr.mxu0 %v51
  %627 = vmatpush1.msra.mxu0 %v50
  %628 = vmatprep.subr.mxu0 %v47
  %629 = vmatpush1.msra.mxu0 %v46
  %630 = vmatprep.subr.mxu0 %v43
  %631 = vmatpush1.msra.mxu0 %v42
  %632 = vmatprep.subr.mxu0 %v39
  %633 = vmatpush1.msra.mxu0 %v38
  %634 = vmatprep.subr.mxu0 %v35
  %635 = vmatpush1.msra.mxu0 %v34
  %636 = vmatprep.subr.mxu0 %v31
  %637 = vmatpush1.msra.mxu0 %v30
  %638 = vmatprep.subr.mxu0 %v27
  %639 = vmatpush1.msra.mxu0 %v26
  %640 = vmatprep.subr.mxu0 %v23
  %641 = vmatpush1.msra.mxu0 %v22
  %642 = vmatprep.subr.mxu0 %v19
  %643 = vmatpush1.msra.mxu0 %v18
  %644 = vmatprep.subr.mxu0 0.0
  %645 = vmatpush2.msra.mxu0 0.0
  %646 = vmatprep.subr.mxu0 0.0
  %647 = vmatpush2.msra.mxu0 0.0
  %648 = vmatprep.subr.mxu0 0.0
  %649 = vmatpush2.msra.mxu0 0.0
  %650 = vmatprep.subr.mxu0 0.0
  %651 = vmatpush2.msra.mxu0 0.0
  %652 = vmatprep.subr.mxu0 0.0
  %653 = vmatpush2.msra.mxu0 0.0
  %654 = vmatprep.subr.mxu0 0.0
  %655 = vmatpush2.msra.mxu0 0.0
  %656 = vmatprep.subr.mxu0 0.0
  %657 = vmatpush2.msra.mxu0 0.0
  %658 = vmatprep.subr.mxu0 0.0
  %659 = vmatpush2.msra.mxu0 0.0
  %660 = vmatprep.subr.mxu0 0.0
  %661 = vmatpush2.msra.mxu0 0.0
  %662 = vmatprep.subr.mxu0 0.0
  %663 = vmatpush2.msra.mxu0 0.0
  %664 = vmatprep.subr.mxu0 0.0
  %665 = vmatpush2.msra.mxu0 0.0
  %666 = vmatprep.subr.mxu0 0.0
  %667 = vmatpush2.msra.mxu0 0.0
  %668 = vmatprep.subr.mxu0 0.0
  %669 = vmatpush2.msra.mxu0 0.0
  %670 = vmatprep.subr.mxu0 0.0
  %671 = vmatpush2.msra.mxu0 0.0
  %672 = vmatprep.subr.mxu0 0.0
  %673 = vmatpush2.msra.mxu0 0.0
  %674 = vmatprep.subr.mxu0 0.0
  %675 = vmatpush2.msra.mxu0 0.0
  %676 = vmatprep.mubr.f32.mxu0 0.0
  %677 = vmatmul.mubr.f32.gmra.mxu0 %v535
  %v678 = vpop.f32.mrf.mxu0
  %v679 = vadd.f32 0.0, %v678
  %v680 = vpop.f32.mrf.mxu0
  %v681 = vadd.f32 0.0, %v680
  %682 = vdwg.mxu0
  %v683 = vadd.f32 %v537, %v608
  %v684 = vadd.f32 %v538, %v610
  %v685 = vadd.f32 %v539, %v679
  %v686 = vadd.f32 %v540, %v681
  %v687 = vmul.f32 %v683, 0.5
  %v688 = vtanh.pop %v687
  %v689 = vmul.f32 %v688, 0.5
  %v690 = vadd.f32 %v689, 0.5
  %v691 = vmul.f32 %v684, 0.5
  %v692 = vtanh.pop %v691
  %v693 = vmul.f32 %v692, 0.5
  %v694 = vadd.f32 %v693, 0.5
  %v695 = vtanh.pop %v685
  %v696 = vmul.f32 %v686, 0.5
  %v697 = vtanh.pop %v696
  %v698 = vmul.f32 %v697, 0.5
  %v699 = vadd.f32 %v698, 0.5
  %v700 = vmul.f32 %v694, %v533
  %v701 = vmul.f32 %v690, %v695
  %v702 = vadd.f32 %v700, %v701
  %v703 = vtanh.pop %v702
  %v704 = vmul.f32 %v699, %v703
  %s705 = scalar_lea.vmem [#allocation2], 96
  %v706 = vld [vmem:[%s705] sm:$0xff]
  %v707 = vld [vmem:[%s705 + $0x8] sm:$0xff]
  %v708 = vld [vmem:[%s705 + $0x10] sm:$0xff]
  %v709 = vld [vmem:[%s705 + $0x18] sm:$0xff]
  %710 = vmatprep.subr.mxu0 %v77
  %711 = vmatpush1.msra.mxu0 %v76
  %712 = vmatprep.subr.mxu0 %v73
  %713 = vmatpush1.msra.mxu0 %v72
  %714 = vmatprep.subr.mxu0 %v69
  %715 = vmatpush1.msra.mxu0 %v68
  %716 = vmatprep.subr.mxu0 %v65
  %717 = vmatpush1.msra.mxu0 %v64
  %718 = vmatprep.subr.mxu0 %v61
  %719 = vmatpush1.msra.mxu0 %v60
  %720 = vmatprep.subr.mxu0 %v57
  %721 = vmatpush1.msra.mxu0 %v56
  %722 = vmatprep.subr.mxu0 %v53
  %723 = vmatpush1.msra.mxu0 %v52
  %724 = vmatprep.subr.mxu0 %v49
  %725 = vmatpush1.msra.mxu0 %v48
  %726 = vmatprep.subr.mxu0 %v45
  %727 = vmatpush1.msra.mxu0 %v44
  %728 = vmatprep.subr.mxu0 %v41
  %729 = vmatpush1.msra.mxu0 %v40
  %730 = vmatprep.subr.mxu0 %v37
  %731 = vmatpush1.msra.mxu0 %v36
  %732 = vmatprep.subr.mxu0 %v33
  %733 = vmatpush1.msra.mxu0 %v32
  %734 = vmatprep.subr.mxu0 %v29
  %735 = vmatpush1.msra.mxu0 %v28
  %736 = vmatprep.subr.mxu0 %v25
  %737 = vmatpush1.msra.mxu0 %v24
  %738 = vmatprep.subr.mxu0 %v21
  %739 = vmatpush1.msra.mxu0 %v20
  %740 = vmatprep.subr.mxu0 %v17
  %741 = vmatpush1.msra.mxu0 %v16
  %742 = vmatprep.subr.mxu0 0.0
  %743 = vmatpush2.msra.mxu0 0.0
  %744 = vmatprep.subr.mxu0 0.0
  %745 = vmatpush2.msra.mxu0 0.0
  %746 = vmatprep.subr.mxu0 0.0
  %747 = vmatpush2.msra.mxu0 0.0
  %748 = vmatprep.subr.mxu0 0.0
  %749 = vmatpush2.msra.mxu0 0.0
  %750 = vmatprep.subr.mxu0 0.0
  %751 = vmatpush2.msra.mxu0 0.0
  %752 = vmatprep.subr.mxu0 0.0
  %753 = vmatpush2.msra.mxu0 0.0
  %754 = vmatprep.subr.mxu0 0.0
  %755 = vmatpush2.msra.mxu0 0.0
  %756 = vmatprep.subr.mxu0 0.0
  %757 = vmatpush2.msra.mxu0 0.0
  %758 = vmatprep.subr.mxu0 0.0
  %759 = vmatpush2.msra.mxu0 0.0
  %760 = vmatprep.subr.mxu0 0.0
  %761 = vmatpush2.msra.mxu0 0.0
  %762 = vmatprep.subr.mxu0 0.0
  %763 = vmatpush2.msra.mxu0 0.0
  %764 = vmatprep.subr.mxu0 0.0
  %765 = vmatpush2.msra.mxu0 0.0
  %766 = vmatprep.subr.mxu0 0.0
  %767 = vmatpush2.msra.mxu0 0.0
  %768 = vmatprep.subr.mxu0 0.0
  %769 = vmatpush2.msra.mxu0 0.0
  %770 = vmatprep.subr.mxu0 0.0
  %771 = vmatpush2.msra.mxu0 0.0
  %772 = vmatprep.subr.mxu0 0.0
  %773 = vmatpush2.msra.mxu0 0.0
  %774 = vmatprep.mubr.f32.mxu0 0.0
  %775 = vmatmul.mubr.f32.gmra.mxu0 %v704
  %v776 = vpop.f32.mrf.mxu0
  %v777 = vadd.f32 0.0, %v776
  %v778 = vpop.f32.mrf.mxu0
  %v779 = vadd.f32 0.0, %v778
  %780 = vdwg.mxu0
  %781 = vmatprep.subr.mxu0 %v79
  %782 = vmatpush1.msra.mxu0 %v78
  %783 = vmatprep.subr.mxu0 %v75
  %784 = vmatpush1.msra.mxu0 %v74
  %785 = vmatprep.subr.mxu0 %v71
  %786 = vmatpush1.msra.mxu0 %v70
  %787 = vmatprep.subr.mxu0 %v67
  %788 = vmatpush1.msra.mxu0 %v66
  %789 = vmatprep.subr.mxu0 %v63
  %790 = vmatpush1.msra.mxu0 %v62
  %791 = vmatprep.subr.mxu0 %v59
  %792 = vmatpush1.msra.mxu0 %v58
  %793 = vmatprep.subr.mxu0 %v55
  %794 = vmatpush1.msra.mxu0 %v54
  %795 = vmatprep.subr.mxu0 %v51
  %796 = vmatpush1.msra.mxu0 %v50
  %797 = vmatprep.subr.mxu0 %v47
  %798 = vmatpush1.msra.mxu0 %v46
  %799 = vmatprep.subr.mxu0 %v43
  %800 = vmatpush1.msra.mxu0 %v42
  %801 = vmatprep.subr.mxu0 %v39
  %802 = vmatpush1.msra.mxu0 %v38
  %803 = vmatprep.subr.mxu0 %v35
  %804 = vmatpush1.msra.mxu0 %v34
  %805 = vmatprep.subr.mxu0 %v31
  %806 = vmatpush1.msra.mxu0 %v30
  %807 = vmatprep.subr.mxu0 %v27
  %808 = vmatpush1.msra.mxu0 %v26
  %809 = vmatprep.subr.mxu0 %v23
  %810 = vmatpush1.msra.mxu0 %v22
  %811 = vmatprep.subr.mxu0 %v19
  %812 = vmatpush1.msra.mxu0 %v18
  %813 = vmatprep.subr.mxu0 0.0
  %814 = vmatpush2.msra.mxu0 0.0
  %815 = vmatprep.subr.mxu0 0.0
  %816 = vmatpush2.msra.mxu0 0.0
  %817 = vmatprep.subr.mxu0 0.0
  %818 = vmatpush2.msra.mxu0 0.0
  %819 = vmatprep.subr.mxu0 0.0
  %820 = vmatpush2.msra.mxu0 0.0
  %821 = vmatprep.subr.mxu0 0.0
  %822 = vmatpush2.msra.mxu0 0.0
  %823 = vmatprep.subr.mxu0 0.0
  %824 = vmatpush2.msra.mxu0 0.0
  %825 = vmatprep.subr.mxu0 0.0
  %826 = vmatpush2.msra.mxu0 0.0
  %827 = vmatprep.subr.mxu0 0.0
  %828 = vmatpush2.msra.mxu0 0.0
  %829 = vmatprep.subr.mxu0 0.0
  %830 = vmatpush2.msra.mxu0 0.0
  %831 = vmatprep.subr.mxu0 0.0
  %832 = vmatpush2.msra.mxu0 0.0
  %833 = vmatprep.subr.mxu0 0.0
  %834 = vmatpush2.msra.mxu0 0.0
  %835 = vmatprep.subr.mxu0 0.0
  %836 = vmatpush2.msra.mxu0 0.0
  %837 = vmatprep.subr.mxu0 0.0
  %838 = vmatpush2.msra.mxu0 0.0
  %839 = vmatprep.subr.mxu0 0.0
  %840 = vmatpush2.msra.mxu0 0.0
  %841 = vmatprep.subr.mxu0 0.0
  %842 = vmatpush2.msra.mxu0 0.0
  %843 = vmatprep.subr.mxu0 0.0
  %844 = vmatpush2.msra.mxu0 0.0
  %845 = vmatprep.mubr.f32.mxu0 0.0
  %846 = vmatmul.mubr.f32.gmra.mxu0 %v704
  %v847 = vpop.f32.mrf.mxu0
  %v848 = vadd.f32 0.0, %v847
  %v849 = vpop.f32.mrf.mxu0
  %v850 = vadd.f32 0.0, %v849
  %851 = vdwg.mxu0
  %v852 = vadd.f32 %v706, %v777
  %v853 = vadd.f32 %v707, %v779
  %v854 = vadd.f32 %v708, %v848
  %v855 = vadd.f32 %v709, %v850
  %v856 = vmul.f32 %v852, 0.5
  %v857 = vtanh.pop %v856
  %v858 = vmul.f32 %v857, 0.5
  %v859 = vadd.f32 %v858, 0.5
  %v860 = vmul.f32 %v853, 0.5
  %v861 = vtanh.pop %v860
  %v862 = vmul.f32 %v861, 0.5
  %v863 = vadd.f32 %v862, 0.5
  %v864 = vtanh.pop %v854
  %v865 = vmul.f32 %v855, 0.5
  %v866 = vtanh.pop %v865
  %v867 = vmul.f32 %v866, 0.5
  %v868 = vadd.f32 %v867, 0.5
  %v869 = vmul.f32 %v863, %v702
  %v870 = vmul.f32 %v859, %v864
  %v871 = vadd.f32 %v869, %v870
  %v872 = vtanh.pop %v871
  %v873 = vmul.f32 %v868, %v872
  %s874 = scalar_lea.vmem [#allocation2], 128
  %v875 = vld [vmem:[%s874] sm:$0xff]
  %v876 = vld [vmem:[%s874 + $0x8] sm:$0xff]
  %v877 = vld [vmem:[%s874 + $0x10] sm:$0xff]
  %v878 = vld [vmem:[%s874 + $0x18] sm:$0xff]
  %879 = vmatprep.subr.mxu0 %v77
  %880 = vmatpush1.msra.mxu0 %v76
  %881 = vmatprep.subr.mxu0 %v73
  %882 = vmatpush1.msra.mxu0 %v72
  %883 = vmatprep.subr.mxu0 %v69
  %884 = vmatpush1.msra.mxu0 %v68
  %885 = vmatprep.subr.mxu0 %v65
  %886 = vmatpush1.msra.mxu0 %v64
  %887 = vmatprep.subr.mxu0 %v61
  %888 = vmatpush1.msra.mxu0 %v60
  %889 = vmatprep.subr.mxu0 %v57
  %890 = vmatpush1.msra.mxu0 %v56
  %891 = vmatprep.subr.mxu0 %v53
  %892 = vmatpush1.msra.mxu0 %v52
  %893 = vmatprep.subr.mxu0 %v49
  %894 = vmatpush1.msra.mxu0 %v48
  %895 = vmatprep.subr.mxu0 %v45
  %896 = vmatpush1.msra.mxu0 %v44
  %897 = vmatprep.subr.mxu0 %v41
  %898 = vmatpush1.msra.mxu0 %v40
  %899 = vmatprep.subr.mxu0 %v37
  %900 = vmatpush1.msra.mxu0 %v36
  %901 = vmatprep.subr.mxu0 %v33
  %902 = vmatpush1.msra.mxu0 %v32
  %903 = vmatprep.subr.mxu0 %v29
  %904 = vmatpush1.msra.mxu0 %v28
  %905 = vmatprep.subr.mxu0 %v25
  %906 = vmatpush1.msra.mxu0 %v24
  %907 = vmatprep.subr.mxu0 %v21
  %908 = vmatpush1.msra.mxu0 %v20
  %909 = vmatprep.subr.mxu0 %v17
  %910 = vmatpush1.msra.mxu0 %v16
  %911 = vmatprep.subr.mxu0 0.0
  %912 = vmatpush2.msra.mxu0 0.0
  %913 = vmatprep.subr.mxu0 0.0
  %914 = vmatpush2.msra.mxu0 0.0
  %915 = vmatprep.subr.mxu0 0.0
  %916 = vmatpush2.msra.mxu0 0.0
  %917 = vmatprep.subr.mxu0 0.0
  %918 = vmatpush2.msra.mxu0 0.0
  %919 = vmatprep.subr.mxu0 0.0
  %920 = vmatpush2.msra.mxu0 0.0
  %921 = vmatprep.subr.mxu0 0.0
  %922 = vmatpush2.msra.mxu0 0.0
  %923 = vmatprep.subr.mxu0 0.0
  %924 = vmatpush2.msra.mxu0 0.0
  %925 = vmatprep.subr.mxu0 0.0
  %926 = vmatpush2.msra.mxu0 0.0
  %927 = vmatprep.subr.mxu0 0.0
  %928 = vmatpush2.msra.mxu0 0.0
  %929 = vmatprep.subr.mxu0 0.0
  %930 = vmatpush2.msra.mxu0 0.0
  %931 = vmatprep.subr.mxu0 0.0
  %932 = vmatpush2.msra.mxu0 0.0
  %933 = vmatprep.subr.mxu0 0.0
  %934 = vmatpush2.msra.mxu0 0.0
  %935 = vmatprep.subr.mxu0 0.0
  %936 = vmatpush2.msra.mxu0 0.0
  %937 = vmatprep.subr.mxu0 0.0
  %938 = vmatpush2.msra.mxu0 0.0
  %939 = vmatprep.subr.mxu0 0.0
  %940 = vmatpush2.msra.mxu0 0.0
  %941 = vmatprep.subr.mxu0 0.0
  %942 = vmatpush2.msra.mxu0 0.0
  %943 = vmatprep.mubr.f32.mxu0 0.0
  %944 = vmatmul.mubr.f32.gmra.mxu0 %v873
  %v945 = vpop.f32.mrf.mxu0
  %v946 = vadd.f32 0.0, %v945
  %v947 = vpop.f32.mrf.mxu0
  %v948 = vadd.f32 0.0, %v947
  %949 = vdwg.mxu0
  %950 = vmatprep.subr.mxu0 %v79
  %951 = vmatpush1.msra.mxu0 %v78
  %952 = vmatprep.subr.mxu0 %v75
  %953 = vmatpush1.msra.mxu0 %v74
  %954 = vmatprep.subr.mxu0 %v71
  %955 = vmatpush1.msra.mxu0 %v70
  %956 = vmatprep.subr.mxu0 %v67
  %957 = vmatpush1.msra.mxu0 %v66
  %958 = vmatprep.subr.mxu0 %v63
  %959 = vmatpush1.msra.mxu0 %v62
  %960 = vmatprep.subr.mxu0 %v59
  %961 = vmatpush1.msra.mxu0 %v58
  %962 = vmatprep.subr.mxu0 %v55
  %963 = vmatpush1.msra.mxu0 %v54
  %964 = vmatprep.subr.mxu0 %v51
  %965 = vmatpush1.msra.mxu0 %v50
  %966 = vmatprep.subr.mxu0 %v47
  %967 = vmatpush1.msra.mxu0 %v46
  %968 = vmatprep.subr.mxu0 %v43
  %969 = vmatpush1.msra.mxu0 %v42
  %970 = vmatprep.subr.mxu0 %v39
  %971 = vmatpush1.msra.mxu0 %v38
  %972 = vmatprep.subr.mxu0 %v35
  %973 = vmatpush1.msra.mxu0 %v34
  %974 = vmatprep.subr.mxu0 %v31
  %975 = vmatpush1.msra.mxu0 %v30
  %976 = vmatprep.subr.mxu0 %v27
  %977 = vmatpush1.msra.mxu0 %v26
  %978 = vmatprep.subr.mxu0 %v23
  %979 = vmatpush1.msra.mxu0 %v22
  %980 = vmatprep.subr.mxu0 %v19
  %981 = vmatpush1.msra.mxu0 %v18
  %982 = vmatprep.subr.mxu0 0.0
  %983 = vmatpush2.msra.mxu0 0.0
  %984 = vmatprep.subr.mxu0 0.0
  %985 = vmatpush2.msra.mxu0 0.0
  %986 = vmatprep.subr.mxu0 0.0
  %987 = vmatpush2.msra.mxu0 0.0
  %988 = vmatprep.subr.mxu0 0.0
  %989 = vmatpush2.msra.mxu0 0.0
  %990 = vmatprep.subr.mxu0 0.0
  %991 = vmatpush2.msra.mxu0 0.0
  %992 = vmatprep.subr.mxu0 0.0
  %993 = vmatpush2.msra.mxu0 0.0
  %994 = vmatprep.subr.mxu0 0.0
  %995 = vmatpush2.msra.mxu0 0.0
  %996 = vmatprep.subr.mxu0 0.0
  %997 = vmatpush2.msra.mxu0 0.0
  %998 = vmatprep.subr.mxu0 0.0
  %999 = vmatpush2.msra.mxu0 0.0
  %1000 = vmatprep.subr.mxu0 0.0
  %1001 = vmatpush2.msra.mxu0 0.0
  %1002 = vmatprep.subr.mxu0 0.0
  %1003 = vmatpush2.msra.mxu0 0.0
  %1004 = vmatprep.subr.mxu0 0.0
  %1005 = vmatpush2.msra.mxu0 0.0
  %1006 = vmatprep.subr.mxu0 0.0
  %1007 = vmatpush2.msra.mxu0 0.0
  %1008 = vmatprep.subr.mxu0 0.0
  %1009 = vmatpush2.msra.mxu0 0.0
  %1010 = vmatprep.subr.mxu0 0.0
  %1011 = vmatpush2.msra.mxu0 0.0
  %1012 = vmatprep.subr.mxu0 0.0
  %1013 = vmatpush2.msra.mxu0 0.0
  %1014 = vmatprep.mubr.f32.mxu0 0.0
  %1015 = vmatmul.mubr.f32.gmra.mxu0 %v873
  %v1016 = vpop.f32.mrf.mxu0
  %v1017 = vadd.f32 0.0, %v1016
  %v1018 = vpop.f32.mrf.mxu0
  %v1019 = vadd.f32 0.0, %v1018
  %1020 = vdwg.mxu0
  %v1021 = vadd.f32 %v875, %v946
  %v1022 = vadd.f32 %v876, %v948
  %v1023 = vadd.f32 %v877, %v1017
  %v1024 = vadd.f32 %v878, %v1019
  %v1025 = vmul.f32 %v1021, 0.5
  %v1026 = vtanh.pop %v1025
  %v1027 = vmul.f32 %v1026, 0.5
  %v1028 = vadd.f32 %v1027, 0.5
  %v1029 = vmul.f32 %v1022, 0.5
  %v1030 = vtanh.pop %v1029
  %v1031 = vmul.f32 %v1030, 0.5
  %v1032 = vadd.f32 %v1031, 0.5
  %v1033 = vtanh.pop %v1023
  %v1034 = vmul.f32 %v1024, 0.5
  %v1035 = vtanh.pop %v1034
  %v1036 = vmul.f32 %v1035, 0.5
  %v1037 = vadd.f32 %v1036, 0.5
  %v1038 = vmul.f32 %v1032, %v871
  %v1039 = vmul.f32 %v1028, %v1033
  %v1040 = vadd.f32 %v1038, %v1039
  %v1041 = vtanh.pop %v1040
  %v1042 = vmul.f32 %v1037, %v1041
  %s1043 = scalar_lea.vmem [#allocation2], 160
  %v1044 = vld [vmem:[%s1043] sm:$0xff]
  %v1045 = vld [vmem:[%s1043 + $0x8] sm:$0xff]
  %v1046 = vld [vmem:[%s1043 + $0x10] sm:$0xff]
  %v1047 = vld [vmem:[%s1043 + $0x18] sm:$0xff]
  %1048 = vmatprep.subr.mxu0 %v77
  %1049 = vmatpush1.msra.mxu0 %v76
  %1050 = vmatprep.subr.mxu0 %v73
  %1051 = vmatpush1.msra.mxu0 %v72
  %1052 = vmatprep.subr.mxu0 %v69
  %1053 = vmatpush1.msra.mxu0 %v68
  %1054 = vmatprep.subr.mxu0 %v65
  %1055 = vmatpush1.msra.mxu0 %v64
  %1056 = vmatprep.subr.mxu0 %v61
  %1057 = vmatpush1.msra.mxu0 %v60
  %1058 = vmatprep.subr.mxu0 %v57
  %1059 = vmatpush1.msra.mxu0 %v56
  %1060 = vmatprep.subr.mxu0 %v53
  %1061 = vmatpush1.msra.mxu0 %v52
  %1062 = vmatprep.subr.mxu0 %v49
  %1063 = vmatpush1.msra.mxu0 %v48
  %1064 = vmatprep.subr.mxu0 %v45
  %1065 = vmatpush1.msra.mxu0 %v44
  %1066 = vmatprep.subr.mxu0 %v41
  %1067 = vmatpush1.msra.mxu0 %v40
  %1068 = vmatprep.subr.mxu0 %v37
  %1069 = vmatpush1.msra.mxu0 %v36
  %1070 = vmatprep.subr.mxu0 %v33
  %1071 = vmatpush1.msra.mxu0 %v32
  %1072 = vmatprep.subr.mxu0 %v29
  %1073 = vmatpush1.msra.mxu0 %v28
  %1074 = vmatprep.subr.mxu0 %v25
  %1075 = vmatpush1.msra.mxu0 %v24
  %1076 = vmatprep.subr.mxu0 %v21
  %1077 = vmatpush1.msra.mxu0 %v20
  %1078 = vmatprep.subr.mxu0 %v17
  %1079 = vmatpush1.msra.mxu0 %v16
  %1080 = vmatprep.subr.mxu0 0.0
  %1081 = vmatpush2.msra.mxu0 0.0
  %1082 = vmatprep.subr.mxu0 0.0
  %1083 = vmatpush2.msra.mxu0 0.0
  %1084 = vmatprep.subr.mxu0 0.0
  %1085 = vmatpush2.msra.mxu0 0.0
  %1086 = vmatprep.subr.mxu0 0.0
  %1087 = vmatpush2.msra.mxu0 0.0
  %1088 = vmatprep.subr.mxu0 0.0
  %1089 = vmatpush2.msra.mxu0 0.0
  %1090 = vmatprep.subr.mxu0 0.0
  %1091 = vmatpush2.msra.mxu0 0.0
  %1092 = vmatprep.subr.mxu0 0.0
  %1093 = vmatpush2.msra.mxu0 0.0
  %1094 = vmatprep.subr.mxu0 0.0
  %1095 = vmatpush2.msra.mxu0 0.0
  %1096 = vmatprep.subr.mxu0 0.0
  %1097 = vmatpush2.msra.mxu0 0.0
  %1098 = vmatprep.subr.mxu0 0.0
  %1099 = vmatpush2.msra.mxu0 0.0
  %1100 = vmatprep.subr.mxu0 0.0
  %1101 = vmatpush2.msra.mxu0 0.0
  %1102 = vmatprep.subr.mxu0 0.0
  %1103 = vmatpush2.msra.mxu0 0.0
  %1104 = vmatprep.subr.mxu0 0.0
  %1105 = vmatpush2.msra.mxu0 0.0
  %1106 = vmatprep.subr.mxu0 0.0
  %1107 = vmatpush2.msra.mxu0 0.0
  %1108 = vmatprep.subr.mxu0 0.0
  %1109 = vmatpush2.msra.mxu0 0.0
  %1110 = vmatprep.subr.mxu0 0.0
  %1111 = vmatpush2.msra.mxu0 0.0
  %1112 = vmatprep.mubr.f32.mxu0 0.0
  %1113 = vmatmul.mubr.f32.gmra.mxu0 %v1042
  %v1114 = vpop.f32.mrf.mxu0
  %v1115 = vadd.f32 0.0, %v1114
  %v1116 = vpop.f32.mrf.mxu0
  %v1117 = vadd.f32 0.0, %v1116
  %1118 = vdwg.mxu0
  %1119 = vmatprep.subr.mxu0 %v79
  %1120 = vmatpush1.msra.mxu0 %v78
  %1121 = vmatprep.subr.mxu0 %v75
  %1122 = vmatpush1.msra.mxu0 %v74
  %1123 = vmatprep.subr.mxu0 %v71
  %1124 = vmatpush1.msra.mxu0 %v70
  %1125 = vmatprep.subr.mxu0 %v67
  %1126 = vmatpush1.msra.mxu0 %v66
  %1127 = vmatprep.subr.mxu0 %v63
  %1128 = vmatpush1.msra.mxu0 %v62
  %1129 = vmatprep.subr.mxu0 %v59
  %1130 = vmatpush1.msra.mxu0 %v58
  %1131 = vmatprep.subr.mxu0 %v55
  %1132 = vmatpush1.msra.mxu0 %v54
  %1133 = vmatprep.subr.mxu0 %v51
  %1134 = vmatpush1.msra.mxu0 %v50
  %1135 = vmatprep.subr.mxu0 %v47
  %1136 = vmatpush1.msra.mxu0 %v46
  %1137 = vmatprep.subr.mxu0 %v43
  %1138 = vmatpush1.msra.mxu0 %v42
  %1139 = vmatprep.subr.mxu0 %v39
  %1140 = vmatpush1.msra.mxu0 %v38
  %1141 = vmatprep.subr.mxu0 %v35
  %1142 = vmatpush1.msra.mxu0 %v34
  %1143 = vmatprep.subr.mxu0 %v31
  %1144 = vmatpush1.msra.mxu0 %v30
  %1145 = vmatprep.subr.mxu0 %v27
  %1146 = vmatpush1.msra.mxu0 %v26
  %1147 = vmatprep.subr.mxu0 %v23
  %1148 = vmatpush1.msra.mxu0 %v22
  %1149 = vmatprep.subr.mxu0 %v19
  %1150 = vmatpush1.msra.mxu0 %v18
  %1151 = vmatprep.subr.mxu0 0.0
  %1152 = vmatpush2.msra.mxu0 0.0
  %1153 = vmatprep.subr.mxu0 0.0
  %1154 = vmatpush2.msra.mxu0 0.0
  %1155 = vmatprep.subr.mxu0 0.0
  %1156 = vmatpush2.msra.mxu0 0.0
  %1157 = vmatprep.subr.mxu0 0.0
  %1158 = vmatpush2.msra.mxu0 0.0
  %1159 = vmatprep.subr.mxu0 0.0
  %1160 = vmatpush2.msra.mxu0 0.0
  %1161 = vmatprep.subr.mxu0 0.0
  %1162 = vmatpush2.msra.mxu0 0.0
  %1163 = vmatprep.subr.mxu0 0.0
  %1164 = vmatpush2.msra.mxu0 0.0
  %1165 = vmatprep.subr.mxu0 0.0
  %1166 = vmatpush2.msra.mxu0 0.0
  %1167 = vmatprep.subr.mxu0 0.0
  %1168 = vmatpush2.msra.mxu0 0.0
  %1169 = vmatprep.subr.mxu0 0.0
  %1170 = vmatpush2.msra.mxu0 0.0
  %1171 = vmatprep.subr.mxu0 0.0
  %1172 = vmatpush2.msra.mxu0 0.0
  %1173 = vmatprep.subr.mxu0 0.0
  %1174 = vmatpush2.msra.mxu0 0.0
  %1175 = vmatprep.subr.mxu0 0.0
  %1176 = vmatpush2.msra.mxu0 0.0
  %1177 = vmatprep.subr.mxu0 0.0
  %1178 = vmatpush2.msra.mxu0 0.0
  %1179 = vmatprep.subr.mxu0 0.0
  %1180 = vmatpush2.msra.mxu0 0.0
  %1181 = vmatprep.subr.mxu0 0.0
  %1182 = vmatpush2.msra.mxu0 0.0
  %1183 = vmatprep.mubr.f32.mxu0 0.0
  %1184 = vmatmul.mubr.f32.gmra.mxu0 %v1042
  %v1185 = vpop.f32.mrf.mxu0
  %v1186 = vadd.f32 0.0, %v1185
  %v1187 = vpop.f32.mrf.mxu0
  %v1188 = vadd.f32 0.0, %v1187
  %1189 = vdwg.mxu0
  %v1190 = vadd.f32 %v1044, %v1115
  %v1191 = vadd.f32 %v1045, %v1117
  %v1192 = vadd.f32 %v1046, %v1186
  %v1193 = vadd.f32 %v1047, %v1188
  %v1194 = vmul.f32 %v1190, 0.5
  %v1195 = vtanh.pop %v1194
  %v1196 = vmul.f32 %v1195, 0.5
  %v1197 = vadd.f32 %v1196, 0.5
  %v1198 = vmul.f32 %v1191, 0.5
  %v1199 = vtanh.pop %v1198
  %v1200 = vmul.f32 %v1199, 0.5
  %v1201 = vadd.f32 %v1200, 0.5
  %v1202 = vtanh.pop %v1192
  %v1203 = vmul.f32 %v1193, 0.5
  %v1204 = vtanh.pop %v1203
  %v1205 = vmul.f32 %v1204, 0.5
  %v1206 = vadd.f32 %v1205, 0.5
  %v1207 = vmul.f32 %v1201, %v1040
  %v1208 = vmul.f32 %v1197, %v1202
  %v1209 = vadd.f32 %v1207, %v1208
  %v1210 = vtanh.pop %v1209
  %v1211 = vmul.f32 %v1206, %v1210
  %s1212 = scalar_lea.vmem [#allocation2], 192
  %v1213 = vld [vmem:[%s1212] sm:$0xff]
  %v1214 = vld [vmem:[%s1212 + $0x8] sm:$0xff]
  %v1215 = vld [vmem:[%s1212 + $0x10] sm:$0xff]
  %v1216 = vld [vmem:[%s1212 + $0x18] sm:$0xff]
  %1217 = vmatprep.subr.mxu0 %v77
  %1218 = vmatpush1.msra.mxu0 %v76
  %1219 = vmatprep.subr.mxu0 %v73
  %1220 = vmatpush1.msra.mxu0 %v72
  %1221 = vmatprep.subr.mxu0 %v69
  %1222 = vmatpush1.msra.mxu0 %v68
  %1223 = vmatprep.subr.mxu0 %v65
  %1224 = vmatpush1.msra.mxu0 %v64
  %1225 = vmatprep.subr.mxu0 %v61
  %1226 = vmatpush1.msra.mxu0 %v60
  %1227 = vmatprep.subr.mxu0 %v57
  %1228 = vmatpush1.msra.mxu0 %v56
  %1229 = vmatprep.subr.mxu0 %v53
  %1230 = vmatpush1.msra.mxu0 %v52
  %1231 = vmatprep.subr.mxu0 %v49
  %1232 = vmatpush1.msra.mxu0 %v48
  %1233 = vmatprep.subr.mxu0 %v45
  %1234 = vmatpush1.msra.mxu0 %v44
  %1235 = vmatprep.subr.mxu0 %v41
  %1236 = vmatpush1.msra.mxu0 %v40
  %1237 = vmatprep.subr.mxu0 %v37
  %1238 = vmatpush1.msra.mxu0 %v36
  %1239 = vmatprep.subr.mxu0 %v33
  %1240 = vmatpush1.msra.mxu0 %v32
  %1241 = vmatprep.subr.mxu0 %v29
  %1242 = vmatpush1.msra.mxu0 %v28
  %1243 = vmatprep.subr.mxu0 %v25
  %1244 = vmatpush1.msra.mxu0 %v24
  %1245 = vmatprep.subr.mxu0 %v21
  %1246 = vmatpush1.msra.mxu0 %v20
  %1247 = vmatprep.subr.mxu0 %v17
  %1248 = vmatpush1.msra.mxu0 %v16
  %1249 = vmatprep.subr.mxu0 0.0
  %1250 = vmatpush2.msra.mxu0 0.0
  %1251 = vmatprep.subr.mxu0 0.0
  %1252 = vmatpush2.msra.mxu0 0.0
  %1253 = vmatprep.subr.mxu0 0.0
  %1254 = vmatpush2.msra.mxu0 0.0
  %1255 = vmatprep.subr.mxu0 0.0
  %1256 = vmatpush2.msra.mxu0 0.0
  %1257 = vmatprep.subr.mxu0 0.0
  %1258 = vmatpush2.msra.mxu0 0.0
  %1259 = vmatprep.subr.mxu0 0.0
  %1260 = vmatpush2.msra.mxu0 0.0
  %1261 = vmatprep.subr.mxu0 0.0
  %1262 = vmatpush2.msra.mxu0 0.0
  %1263 = vmatprep.subr.mxu0 0.0
  %1264 = vmatpush2.msra.mxu0 0.0
  %1265 = vmatprep.subr.mxu0 0.0
  %1266 = vmatpush2.msra.mxu0 0.0
  %1267 = vmatprep.subr.mxu0 0.0
  %1268 = vmatpush2.msra.mxu0 0.0
  %1269 = vmatprep.subr.mxu0 0.0
  %1270 = vmatpush2.msra.mxu0 0.0
  %1271 = vmatprep.subr.mxu0 0.0
  %1272 = vmatpush2.msra.mxu0 0.0
  %1273 = vmatprep.subr.mxu0 0.0
  %1274 = vmatpush2.msra.mxu0 0.0
  %1275 = vmatprep.subr.mxu0 0.0
  %1276 = vmatpush2.msra.mxu0 0.0
  %1277 = vmatprep.subr.mxu0 0.0
  %1278 = vmatpush2.msra.mxu0 0.0
  %1279 = vmatprep.subr.mxu0 0.0
  %1280 = vmatpush2.msra.mxu0 0.0
  %1281 = vmatprep.mubr.f32.mxu0 0.0
  %1282 = vmatmul.mubr.f32.gmra.mxu0 %v1211
  %v1283 = vpop.f32.mrf.mxu0
  %v1284 = vadd.f32 0.0, %v1283
  %v1285 = vpop.f32.mrf.mxu0
  %v1286 = vadd.f32 0.0, %v1285
  %1287 = vdwg.mxu0
  %1288 = vmatprep.subr.mxu0 %v79
  %1289 = vmatpush1.msra.mxu0 %v78
  %1290 = vmatprep.subr.mxu0 %v75
  %1291 = vmatpush1.msra.mxu0 %v74
  %1292 = vmatprep.subr.mxu0 %v71
  %1293 = vmatpush1.msra.mxu0 %v70
  %1294 = vmatprep.subr.mxu0 %v67
  %1295 = vmatpush1.msra.mxu0 %v66
  %1296 = vmatprep.subr.mxu0 %v63
  %1297 = vmatpush1.msra.mxu0 %v62
  %1298 = vmatprep.subr.mxu0 %v59
  %1299 = vmatpush1.msra.mxu0 %v58
  %1300 = vmatprep.subr.mxu0 %v55
  %1301 = vmatpush1.msra.mxu0 %v54
  %1302 = vmatprep.subr.mxu0 %v51
  %1303 = vmatpush1.msra.mxu0 %v50
  %1304 = vmatprep.subr.mxu0 %v47
  %1305 = vmatpush1.msra.mxu0 %v46
  %1306 = vmatprep.subr.mxu0 %v43
  %1307 = vmatpush1.msra.mxu0 %v42
  %1308 = vmatprep.subr.mxu0 %v39
  %1309 = vmatpush1.msra.mxu0 %v38
  %1310 = vmatprep.subr.mxu0 %v35
  %1311 = vmatpush1.msra.mxu0 %v34
  %1312 = vmatprep.subr.mxu0 %v31
  %1313 = vmatpush1.msra.mxu0 %v30
  %1314 = vmatprep.subr.mxu0 %v27
  %1315 = vmatpush1.msra.mxu0 %v26
  %1316 = vmatprep.subr.mxu0 %v23
  %1317 = vmatpush1.msra.mxu0 %v22
  %1318 = vmatprep.subr.mxu0 %v19
  %1319 = vmatpush1.msra.mxu0 %v18
  %1320 = vmatprep.subr.mxu0 0.0
  %1321 = vmatpush2.msra.mxu0 0.0
  %1322 = vmatprep.subr.mxu0 0.0
  %1323 = vmatpush2.msra.mxu0 0.0
  %1324 = vmatprep.subr.mxu0 0.0
  %1325 = vmatpush2.msra.mxu0 0.0
  %1326 = vmatprep.subr.mxu0 0.0
  %1327 = vmatpush2.msra.mxu0 0.0
  %1328 = vmatprep.subr.mxu0 0.0
  %1329 = vmatpush2.msra.mxu0 0.0
  %1330 = vmatprep.subr.mxu0 0.0
  %1331 = vmatpush2.msra.mxu0 0.0
  %1332 = vmatprep.subr.mxu0 0.0
  %1333 = vmatpush2.msra.mxu0 0.0
  %1334 = vmatprep.subr.mxu0 0.0
  %1335 = vmatpush2.msra.mxu0 0.0
  %1336 = vmatprep.subr.mxu0 0.0
  %1337 = vmatpush2.msra.mxu0 0.0
  %1338 = vmatprep.subr.mxu0 0.0
  %1339 = vmatpush2.msra.mxu0 0.0
  %1340 = vmatprep.subr.mxu0 0.0
  %1341 = vmatpush2.msra.mxu0 0.0
  %1342 = vmatprep.subr.mxu0 0.0
  %1343 = vmatpush2.msra.mxu0 0.0
  %1344 = vmatprep.subr.mxu0 0.0
  %1345 = vmatpush2.msra.mxu0 0.0
  %1346 = vmatprep.subr.mxu0 0.0
  %1347 = vmatpush2.msra.mxu0 0.0
  %1348 = vmatprep.subr.mxu0 0.0
  %1349 = vmatpush2.msra.mxu0 0.0
  %1350 = vmatprep.subr.mxu0 0.0
  %1351 = vmatpush2.msra.mxu0 0.0
  %1352 = vmatprep.mubr.f32.mxu0 0.0
  %1353 = vmatmul.mubr.f32.gmra.mxu0 %v1211
  %v1354 = vpop.f32.mrf.mxu0
  %v1355 = vadd.f32 0.0, %v1354
  %v1356 = vpop.f32.mrf.mxu0
  %v1357 = vadd.f32 0.0, %v1356
  %1358 = vdwg.mxu0
  %v1359 = vadd.f32 %v1213, %v1284
  %v1360 = vadd.f32 %v1214, %v1286
  %v1361 = vadd.f32 %v1215, %v1355
  %v1362 = vadd.f32 %v1216, %v1357
  %v1363 = vmul.f32 %v1359, 0.5
  %v1364 = vtanh.pop %v1363
  %v1365 = vmul.f32 %v1364, 0.5
  %v1366 = vadd.f32 %v1365, 0.5
  %v1367 = vmul.f32 %v1360, 0.5
  %v1368 = vtanh.pop %v1367
  %v1369 = vmul.f32 %v1368, 0.5
  %v1370 = vadd.f32 %v1369, 0.5
  %v1371 = vtanh.pop %v1361
  %v1372 = vmul.f32 %v1362, 0.5
  %v1373 = vtanh.pop %v1372
  %v1374 = vmul.f32 %v1373, 0.5
  %v1375 = vadd.f32 %v1374, 0.5
  %v1376 = vmul.f32 %v1370, %v1209
  %v1377 = vmul.f32 %v1366, %v1371
  %v1378 = vadd.f32 %v1376, %v1377
  %v1379 = vtanh.pop %v1378
  %v1380 = vmul.f32 %v1375, %v1379
  %s1381 = scalar_lea.vmem [#allocation2], 224
  %v1382 = vld [vmem:[%s1381] sm:$0xff]
  %v1383 = vld [vmem:[%s1381 + $0x8] sm:$0xff]
  %v1384 = vld [vmem:[%s1381 + $0x10] sm:$0xff]
  %v1385 = vld [vmem:[%s1381 + $0x18] sm:$0xff]
  %1386 = vmatprep.subr.mxu0 %v77
  %1387 = vmatpush1.msra.mxu0 %v76
  %1388 = vmatprep.subr.mxu0 %v73
  %1389 = vmatpush1.msra.mxu0 %v72
  %1390 = vmatprep.subr.mxu0 %v69
  %1391 = vmatpush1.msra.mxu0 %v68
  %1392 = vmatprep.subr.mxu0 %v65
  %1393 = vmatpush1.msra.mxu0 %v64
  %1394 = vmatprep.subr.mxu0 %v61
  %1395 = vmatpush1.msra.mxu0 %v60
  %1396 = vmatprep.subr.mxu0 %v57
  %1397 = vmatpush1.msra.mxu0 %v56
  %1398 = vmatprep.subr.mxu0 %v53
  %1399 = vmatpush1.msra.mxu0 %v52
  %1400 = vmatprep.subr.mxu0 %v49
  %1401 = vmatpush1.msra.mxu0 %v48
  %1402 = vmatprep.subr.mxu0 %v45
  %1403 = vmatpush1.msra.mxu0 %v44
  %1404 = vmatprep.subr.mxu0 %v41
  %1405 = vmatpush1.msra.mxu0 %v40
  %1406 = vmatprep.subr.mxu0 %v37
  %1407 = vmatpush1.msra.mxu0 %v36
  %1408 = vmatprep.subr.mxu0 %v33
  %1409 = vmatpush1.msra.mxu0 %v32
  %1410 = vmatprep.subr.mxu0 %v29
  %1411 = vmatpush1.msra.mxu0 %v28
  %1412 = vmatprep.subr.mxu0 %v25
  %1413 = vmatpush1.msra.mxu0 %v24
  %1414 = vmatprep.subr.mxu0 %v21
  %1415 = vmatpush1.msra.mxu0 %v20
  %1416 = vmatprep.subr.mxu0 %v17
  %1417 = vmatpush1.msra.mxu0 %v16
  %1418 = vmatprep.subr.mxu0 0.0
  %1419 = vmatpush2.msra.mxu0 0.0
  %1420 = vmatprep.subr.mxu0 0.0
  %1421 = vmatpush2.msra.mxu0 0.0
  %1422 = vmatprep.subr.mxu0 0.0
  %1423 = vmatpush2.msra.mxu0 0.0
  %1424 = vmatprep.subr.mxu0 0.0
  %1425 = vmatpush2.msra.mxu0 0.0
  %1426 = vmatprep.subr.mxu0 0.0
  %1427 = vmatpush2.msra.mxu0 0.0
  %1428 = vmatprep.subr.mxu0 0.0
  %1429 = vmatpush2.msra.mxu0 0.0
  %1430 = vmatprep.subr.mxu0 0.0
  %1431 = vmatpush2.msra.mxu0 0.0
  %1432 = vmatprep.subr.mxu0 0.0
  %1433 = vmatpush2.msra.mxu0 0.0
  %1434 = vmatprep.subr.mxu0 0.0
  %1435 = vmatpush2.msra.mxu0 0.0
  %1436 = vmatprep.subr.mxu0 0.0
  %1437 = vmatpush2.msra.mxu0 0.0
  %1438 = vmatprep.subr.mxu0 0.0
  %1439 = vmatpush2.msra.mxu0 0.0
  %1440 = vmatprep.subr.mxu0 0.0
  %1441 = vmatpush2.msra.mxu0 0.0
  %1442 = vmatprep.subr.mxu0 0.0
  %1443 = vmatpush2.msra.mxu0 0.0
  %1444 = vmatprep.subr.mxu0 0.0
  %1445 = vmatpush2.msra.mxu0 0.0
  %1446 = vmatprep.subr.mxu0 0.0
  %1447 = vmatpush2.msra.mxu0 0.0
  %1448 = vmatprep.subr.mxu0 0.0
  %1449 = vmatpush2.msra.mxu0 0.0
  %1450 = vmatprep.mubr.f32.mxu0 0.0
  %1451 = vmatmul.mubr.f32.gmra.mxu0 %v1380
  %v1452 = vpop.f32.mrf.mxu0
  %v1453 = vadd.f32 0.0, %v1452
  %v1454 = vpop.f32.mrf.mxu0
  %v1455 = vadd.f32 0.0, %v1454
  %1456 = vdwg.mxu0
  %1457 = vmatprep.subr.mxu0 %v79
  %1458 = vmatpush1.msra.mxu0 %v78
  %1459 = vmatprep.subr.mxu0 %v75
  %1460 = vmatpush1.msra.mxu0 %v74
  %1461 = vmatprep.subr.mxu0 %v71
  %1462 = vmatpush1.msra.mxu0 %v70
  %1463 = vmatprep.subr.mxu0 %v67
  %1464 = vmatpush1.msra.mxu0 %v66
  %1465 = vmatprep.subr.mxu0 %v63
  %1466 = vmatpush1.msra.mxu0 %v62
  %1467 = vmatprep.subr.mxu0 %v59
  %1468 = vmatpush1.msra.mxu0 %v58
  %1469 = vmatprep.subr.mxu0 %v55
  %1470 = vmatpush1.msra.mxu0 %v54
  %1471 = vmatprep.subr.mxu0 %v51
  %1472 = vmatpush1.msra.mxu0 %v50
  %1473 = vmatprep.subr.mxu0 %v47
  %1474 = vmatpush1.msra.mxu0 %v46
  %1475 = vmatprep.subr.mxu0 %v43
  %1476 = vmatpush1.msra.mxu0 %v42
  %1477 = vmatprep.subr.mxu0 %v39
  %1478 = vmatpush1.msra.mxu0 %v38
  %1479 = vmatprep.subr.mxu0 %v35
  %1480 = vmatpush1.msra.mxu0 %v34
  %1481 = vmatprep.subr.mxu0 %v31
  %1482 = vmatpush1.msra.mxu0 %v30
  %1483 = vmatprep.subr.mxu0 %v27
  %1484 = vmatpush1.msra.mxu0 %v26
  %1485 = vmatprep.subr.mxu0 %v23
  %1486 = vmatpush1.msra.mxu0 %v22
  %1487 = vmatprep.subr.mxu0 %v19
  %1488 = vmatpush1.msra.mxu0 %v18
  %1489 = vmatprep.subr.mxu0 0.0
  %1490 = vmatpush2.msra.mxu0 0.0
  %1491 = vmatprep.subr.mxu0 0.0
  %1492 = vmatpush2.msra.mxu0 0.0
  %1493 = vmatprep.subr.mxu0 0.0
  %1494 = vmatpush2.msra.mxu0 0.0
  %1495 = vmatprep.subr.mxu0 0.0
  %1496 = vmatpush2.msra.mxu0 0.0
  %1497 = vmatprep.subr.mxu0 0.0
  %1498 = vmatpush2.msra.mxu0 0.0
  %1499 = vmatprep.subr.mxu0 0.0
  %1500 = vmatpush2.msra.mxu0 0.0
  %1501 = vmatprep.subr.mxu0 0.0
  %1502 = vmatpush2.msra.mxu0 0.0
  %1503 = vmatprep.subr.mxu0 0.0
  %1504 = vmatpush2.msra.mxu0 0.0
  %1505 = vmatprep.subr.mxu0 0.0
  %1506 = vmatpush2.msra.mxu0 0.0
  %1507 = vmatprep.subr.mxu0 0.0
  %1508 = vmatpush2.msra.mxu0 0.0
  %1509 = vmatprep.subr.mxu0 0.0
  %1510 = vmatpush2.msra.mxu0 0.0
  %1511 = vmatprep.subr.mxu0 0.0
  %1512 = vmatpush2.msra.mxu0 0.0
  %1513 = vmatprep.subr.mxu0 0.0
  %1514 = vmatpush2.msra.mxu0 0.0
  %1515 = vmatprep.subr.mxu0 0.0
  %1516 = vmatpush2.msra.mxu0 0.0
  %1517 = vmatprep.subr.mxu0 0.0
  %1518 = vmatpush2.msra.mxu0 0.0
  %1519 = vmatprep.subr.mxu0 0.0
  %1520 = vmatpush2.msra.mxu0 0.0
  %1521 = vmatprep.mubr.f32.mxu0 0.0
  %1522 = vmatmul.mubr.f32.gmra.mxu0 %v1380
  %v1523 = vpop.f32.mrf.mxu0
  %v1524 = vadd.f32 0.0, %v1523
  %v1525 = vpop.f32.mrf.mxu0
  %v1526 = vadd.f32 0.0, %v1525
  %1527 = vdwg.mxu0
  %v1528 = vadd.f32 %v1382, %v1453
  %v1529 = vadd.f32 %v1383, %v1455
  %v1530 = vadd.f32 %v1384, %v1524
  %v1531 = vadd.f32 %v1385, %v1526
  %v1532 = vmul.f32 %v1528, 0.5
  %v1533 = vtanh.pop %v1532
  %v1534 = vmul.f32 %v1533, 0.5
  %v1535 = vadd.f32 %v1534, 0.5
  %v1536 = vmul.f32 %v1529, 0.5
  %v1537 = vtanh.pop %v1536
  %v1538 = vmul.f32 %v1537, 0.5
  %v1539 = vadd.f32 %v1538, 0.5
  %v1540 = vtanh.pop %v1530
  %v1541 = vmul.f32 %v1531, 0.5
  %v1542 = vtanh.pop %v1541
  %v1543 = vmul.f32 %v1542, 0.5
  %v1544 = vadd.f32 %v1543, 0.5
  %v1545 = vmul.f32 %v1539, %v1378
  %v1546 = vmul.f32 %v1535, %v1540
  %v1547 = vadd.f32 %v1545, %v1546
  %v1548 = vtanh.pop %v1547
  %v1549 = vmul.f32 %v1544, %v1548
  %1550 = vst [vmem:[#allocation3] sm:$0xff] %v1549
  %1551 = vst [vmem:[#allocation4] sm:$0xff] %v1547
  %v1552 = vld [vmem:[#allocation3] sm:$0xff]
  %v1553 = vld [vmem:[%s2] sm:$0xff]
  %v1554 = vld [vmem:[%s2 + $0x8] sm:$0xff]
  %v1555 = vld [vmem:[%s2 + $0x10] sm:$0xff]
  %v1556 = vld [vmem:[%s2 + $0x18] sm:$0xff]
  %v1557 = vld [vmem:[%s2 + $0x20] sm:$0xff]
  %v1558 = vld [vmem:[%s2 + $0x28] sm:$0xff]
  %v1559 = vld [vmem:[%s2 + $0x30] sm:$0xff]
  %v1560 = vld [vmem:[%s2 + $0x38] sm:$0xff]
  %v1561 = vld [vmem:[%s2 + $0x40] sm:$0xff]
  %v1562 = vld [vmem:[%s2 + $0x48] sm:$0xff]
  %v1563 = vld [vmem:[%s2 + $0x50] sm:$0xff]
  %v1564 = vld [vmem:[%s2 + $0x58] sm:$0xff]
  %v1565 = vld [vmem:[%s2 + $0x60] sm:$0xff]
  %v1566 = vld [vmem:[%s2 + $0x68] sm:$0xff]
  %v1567 = vld [vmem:[%s2 + $0x70] sm:$0xff]
  %v1568 = vld [vmem:[%s2 + $0x78] sm:$0xff]
  %v1569 = vld [vmem:[%s3] sm:$0x1]
  %v1571 = vlaneseq
  %v1572 = vshrl.u32 %v1571, 7
  %v1573 = vsub.s32 0, %v1572
  %v1574 = vrot.slane %v1569, %v1573
  %1576 = vmatprep.subr.mxu0 0.0
  %1577 = vmatpush1.msra.mxu0 %v1568
  %1578 = vmatprep.subr.mxu0 0.0
  %1579 = vmatpush1.msra.mxu0 %v1567
  %1580 = vmatprep.subr.mxu0 0.0
  %1581 = vmatpush1.msra.mxu0 %v1566
  %1582 = vmatprep.subr.mxu0 0.0
  %1583 = vmatpush1.msra.mxu0 %v1565
  %1584 = vmatprep.subr.mxu0 0.0
  %1585 = vmatpush1.msra.mxu0 %v1564
  %1586 = vmatprep.subr.mxu0 0.0
  %1587 = vmatpush1.msra.mxu0 %v1563
  %1588 = vmatprep.subr.mxu0 0.0
  %1589 = vmatpush1.msra.mxu0 %v1562
  %1590 = vmatprep.subr.mxu0 0.0
  %1591 = vmatpush1.msra.mxu0 %v1561
  %1592 = vmatprep.subr.mxu0 0.0
  %1593 = vmatpush1.msra.mxu0 %v1560
  %1594 = vmatprep.subr.mxu0 0.0
  %1595 = vmatpush1.msra.mxu0 %v1559
  %1596 = vmatprep.subr.mxu0 0.0
  %1597 = vmatpush1.msra.mxu0 %v1558
  %1598 = vmatprep.subr.mxu0 0.0
  %1599 = vmatpush1.msra.mxu0 %v1557
  %1600 = vmatprep.subr.mxu0 0.0
  %1601 = vmatpush1.msra.mxu0 %v1556
  %1602 = vmatprep.subr.mxu0 0.0
  %1603 = vmatpush1.msra.mxu0 %v1555
  %1604 = vmatprep.subr.mxu0 0.0
  %1605 = vmatpush1.msra.mxu0 %v1554
  %1606 = vmatprep.subr.mxu0 0.0
  %1607 = vmatpush1.msra.mxu0 %v1553
  %1608 = vmatprep.subr.mxu0 0.0
  %1609 = vmatpush2.msra.mxu0 0.0
  %1610 = vmatprep.subr.mxu0 0.0
  %1611 = vmatpush2.msra.mxu0 0.0
  %1612 = vmatprep.subr.mxu0 0.0
  %1613 = vmatpush2.msra.mxu0 0.0
  %1614 = vmatprep.subr.mxu0 0.0
  %1615 = vmatpush2.msra.mxu0 0.0
  %1616 = vmatprep.subr.mxu0 0.0
  %1617 = vmatpush2.msra.mxu0 0.0
  %1618 = vmatprep.subr.mxu0 0.0
  %1619 = vmatpush2.msra.mxu0 0.0
  %1620 = vmatprep.subr.mxu0 0.0
  %1621 = vmatpush2.msra.mxu0 0.0
  %1622 = vmatprep.subr.mxu0 0.0
  %1623 = vmatpush2.msra.mxu0 0.0
  %1624 = vmatprep.subr.mxu0 0.0
  %1625 = vmatpush2.msra.mxu0 0.0
  %1626 = vmatprep.subr.mxu0 0.0
  %1627 = vmatpush2.msra.mxu0 0.0
  %1628 = vmatprep.subr.mxu0 0.0
  %1629 = vmatpush2.msra.mxu0 0.0
  %1630 = vmatprep.subr.mxu0 0.0
  %1631 = vmatpush2.msra.mxu0 0.0
  %1632 = vmatprep.subr.mxu0 0.0
  %1633 = vmatpush2.msra.mxu0 0.0
  %1634 = vmatprep.subr.mxu0 0.0
  %1635 = vmatpush2.msra.mxu0 0.0
  %1636 = vmatprep.subr.mxu0 0.0
  %1637 = vmatpush2.msra.mxu0 0.0
  %1638 = vmatprep.subr.mxu0 0.0
  %1639 = vmatpush2.msra.mxu0 0.0
  %1640 = vmatprep.mubr.f32.mxu0 0.0
  %1641 = vmatmul.mubr.f32.gmra.mxu0 %v1552
  %v1642 = vpop.f32.mrf.mxu0
  %v1643 = vadd.f32 %v1574, %v1642
  %v1644 = vpop.f32.mrf.mxu0
  %1645 = vdwg.mxu0
  %1646 = vst [vmem:[%s4] sm:$0xff] %v1643
  // Predicated region
  $region48: #{bilstm_forward.1} parent=0 // pred_check
    _
  $region49: #{bilstm_forward.1} parent=0 // pred_check_branch
    %1648 = sbr.rel (0) target = $region51
  $region50: #{bilstm_forward.1} parent=0 // pred_region
    _
  $region51: #{bilstm_forward.1} parent=0 // pred_fallthru
    _
  // Predicated region
  $region52: #{bilstm_forward.1} parent=0 // pred_check
    _
  $region53: #{bilstm_forward.1} parent=0 // pred_check_branch
    %1650 = sbr.rel (0) target = $region55
  $region54: #{bilstm_forward.1} parent=0 // pred_region
    _
  $region55: #{bilstm_forward.1} parent=0 // pred_fallthru
    _
  %1651 = vsyncmov [#allocation5]
  %s1652 = vpop.sfrf %1651
  %p1653 = scmp.eq.s32.totalorder %s1652, 0
  %p1654 = pneg %p1653
  %1656 = shalt.err (%p1654)
  %s1657 = scalar_lea.sflag [#allocation5], 1
  %1658 = vsyncmov %s1657
  %s1659 = vpop.sfrf %1658
  %p1660 = scmp.eq.s32.totalorder %s1659, 0
  %p1661 = pneg %p1660
  %1663 = shalt.err (%p1661)

</llo_original>
